<compile_context>
chip_gen: v6e
topology: v6e:2x2x1
jax: 0.10.0
libtpu: 0.0.40
codegen_flags: <defaults>
</compile_context>

<pallas_src>
import functools

import jax
import jax.numpy as jnp
from jax.experimental import pallas as pl
from jax.experimental.pallas import tpu as pltpu

LATENT_DIM = 200
HIDDEN_DIM = 400
OUTPUT_DIM = 784  # e.g. 28*28 MNIST reconstruction
BATCH = 8


def _leaky_relu(x, slope=0.2):
    return jnp.where(x > 0, x, slope * x)


def _round_up(n, m):
    return ((n + m - 1) // m) * m


def decoder_kernel(x_ref, w1_ref, b1_ref, w2_ref, b2_ref, w3_ref, b3_ref,
                   out_ref):
    # Activations are f32; weights arrive as bf16.  Cast the LHS to bf16
    # right at the dot so the MXU runs bf16 x bf16 with f32 accumulation.
    x = x_ref[...]

    # FC_hidden + LeakyReLU(0.2)
    h = jnp.dot(x.astype(jnp.bfloat16), w1_ref[...],
                preferred_element_type=jnp.float32)
    h = _leaky_relu(h + b1_ref[...])

    # FC_hidden2 + LeakyReLU(0.2)
    h = jnp.dot(h.astype(jnp.bfloat16), w2_ref[...],
                preferred_element_type=jnp.float32)
    h = _leaky_relu(h + b2_ref[...])

    # FC_output + sigmoid
    y = jnp.dot(h.astype(jnp.bfloat16), w3_ref[...],
                preferred_element_type=jnp.float32)
    out_ref[...] = jax.nn.sigmoid(y + b3_ref[...]).astype(out_ref.dtype)


def prepare_decoder_params(params, weight_dtype=jnp.bfloat16):
    """Pad + cast weights ONCE, outside the per-call hot path.

    Contraction (sublane) dims only need the bf16 packing multiple of 16;
    only the HBM-stored output lane dim keeps 128 alignment so the kernel's
    final stores are unmasked.  Returns (padded_params, out_dim).
    """
    w1, b1, w2, b2, w3, b3 = params
    latent, hidden = w1.shape
    out_dim = w3.shape[1]

    lat_p = _round_up(latent, 16)     # 200 -> 208
    hid_p = _round_up(hidden, 16)     # 400 -> 400 (already aligned)
    out_p = _round_up(out_dim, 128)   # 784 -> 896 (lane-dense output)

    def pad_w(w, rows, cols):
        w = jnp.pad(w, ((0, rows - w.shape[0]), (0, cols - w.shape[1])))
        return w.astype(weight_dtype)  # halve weight HBM traffic, bf16 MXU

    def pad_b(b, cols):
        return jnp.pad(b, ((0, 0), (0, cols - b.shape[1])))  # stays f32

    padded = (pad_w(w1, lat_p, hid_p), pad_b(b1, hid_p),
              pad_w(w2, hid_p, hid_p), pad_b(b2, hid_p),
              pad_w(w3, hid_p, out_p), pad_b(b3, out_p))
    return padded, out_dim


@functools.partial(jax.jit,
                   static_argnames=("out_dim", "tile_m", "out_dtype"))
def decoder_forward(x, padded_params, *, out_dim, tile_m=256,
                    out_dtype=jnp.float32):
    """Fused decoder forward; `padded_params` from prepare_decoder_params."""
    w1p, b1p, w2p, b2p, w3p, b3p = padded_params
    batch, latent = x.shape
    lat_p, hid_p = w1p.shape
    out_p = w3p.shape[1]

    # Batch tile: multiple of 8, at most tile_m; pad batch to a tile multiple.
    # For large batches the grid has >=2 steps so the "parallel" axis can
    # shard across both TensorCores on v7x (duplicated weight fetch is
    # amortized there).  At batch=8 the grid is 1 step and DMA-bound anyway.
    tm = min(tile_m, _round_up(batch, 8))
    b_p = _round_up(batch, tm)

    xp = jnp.pad(x, ((0, b_p - batch), (0, lat_p - latent)))

    resident = lambda i: (0, 0)   # weights/biases: same block for every tile

    out = pl.pallas_call(
        decoder_kernel,
        out_shape=jax.ShapeDtypeStruct((b_p, out_p), out_dtype),
        grid=(b_p // tm,),
        in_specs=[
            pl.BlockSpec((tm, lat_p), lambda i: (i, 0)),   # x batch tile
            pl.BlockSpec((lat_p, hid_p), resident),        # w1 (bf16)
            pl.BlockSpec((1, hid_p), resident),            # b1 (f32)
            pl.BlockSpec((hid_p, hid_p), resident),        # w2 (bf16)
            pl.BlockSpec((1, hid_p), resident),            # b2 (f32)
            pl.BlockSpec((hid_p, out_p), resident),        # w3 (bf16)
            pl.BlockSpec((1, out_p), resident),            # b3 (f32)
        ],
        out_specs=pl.BlockSpec((tm, out_p), lambda i: (i, 0)),
        compiler_params=pltpu.CompilerParams(
            dimension_semantics=("parallel",)),
    )(xp, w1p, b1p, w2p, b2p, w3p, b3p)

    # Slice away batch padding and the padded output columns.
    return out[:batch, :out_dim]


def init_params(key, latent_dim, hidden_dim, output_dim):
    """Deterministic synthetic params (PyTorch-Linear-like uniform init)."""
    ks = jax.random.split(key, 6)

    def lin(kw, kb, fan_in, fan_out):
        bound = 1.0 / jnp.sqrt(fan_in)
        w = jax.random.uniform(kw, (fan_in, fan_out), jnp.float32,
                               -bound, bound)
        b = jax.random.uniform(kb, (1, fan_out), jnp.float32, -bound, bound)
        return w, b

    w1, b1 = lin(ks[0], ks[1], latent_dim, hidden_dim)
    w2, b2 = lin(ks[2], ks[3], hidden_dim, hidden_dim)
    w3, b3 = lin(ks[4], ks[5], hidden_dim, output_dim)
    return (w1, b1, w2, b2, w3, b3)


def decoder_reference(x, params):
    """Pure-f32 reference matching the PyTorch module semantics."""
    w1, b1, w2, b2, w3, b3 = params
    h = _leaky_relu(x @ w1 + b1)
    h = _leaky_relu(h @ w2 + b2)
    return jax.nn.sigmoid(h @ w3 + b3)


if __name__ == "__main__":
    key = jax.random.PRNGKey(0)
    k_x, k_p = jax.random.split(key)

    x = jax.random.normal(k_x, (BATCH, LATENT_DIM), jnp.float32)
    params = init_params(k_p, LATENT_DIM, HIDDEN_DIM, OUTPUT_DIM)

    # One-time pad + bf16 cast, hoisted out of the per-call path.
    padded_params, out_dim = prepare_decoder_params(params)
    padded_params = jax.block_until_ready(padded_params)

    out = decoder_forward(x, padded_params, out_dim=out_dim)
    out = jax.block_until_ready(out)

    ref = decoder_reference(x, params)
    assert out.shape == (BATCH, OUTPUT_DIM)
    # Weights feeding the MXU are bf16, so compare against the f32 reference
    # with a tolerance that covers bf16 rounding.
    assert jnp.allclose(out, ref, atol=2e-2, rtol=2e-2), (
        float(jnp.max(jnp.abs(out - ref))))

    print("KERNEL_OK")
</pallas_src>

<mosaic_0001>
module attributes {stable_mosaic.version = 11 : i64} {
  func.func @decoder_kernel(%arg0: i32, %arg1: memref<8x208xf32, #tpu.memory_space<vmem>>, %arg2: memref<208x400xbf16, #tpu.memory_space<vmem>>, %arg3: memref<1x400xf32, #tpu.memory_space<vmem>>, %arg4: memref<400x400xbf16, #tpu.memory_space<vmem>>, %arg5: memref<1x400xf32, #tpu.memory_space<vmem>>, %arg6: memref<400x896xbf16, #tpu.memory_space<vmem>>, %arg7: memref<1x896xf32, #tpu.memory_space<vmem>>, %arg8: memref<8x896xf32, #tpu.memory_space<vmem>>) attributes {dimension_semantics = [#tpu.dimension_semantics<parallel>], iteration_bounds = array<i64: 1>, scalar_prefetch = 0 : i64, scratch_operands = 0 : i64, tpu.core_type = #tpu.core_type<tc>, window_params = [{transform_indices = @transform_0, window_bounds = array<i64: 8, 208>}, {pipeline_mode = #tpu.pipeline_mode<synchronous>, transform_indices = @transform_1, window_bounds = array<i64: 208, 400>}, {pipeline_mode = #tpu.pipeline_mode<synchronous>, transform_indices = @transform_2, window_bounds = array<i64: 1, 400>}, {pipeline_mode = #tpu.pipeline_mode<synchronous>, transform_indices = @transform_3, window_bounds = array<i64: 400, 400>}, {pipeline_mode = #tpu.pipeline_mode<synchronous>, transform_indices = @transform_4, window_bounds = array<i64: 1, 400>}, {pipeline_mode = #tpu.pipeline_mode<synchronous>, transform_indices = @transform_5, window_bounds = array<i64: 400, 896>}, {pipeline_mode = #tpu.pipeline_mode<synchronous>, transform_indices = @transform_6, window_bounds = array<i64: 1, 896>}, {transform_indices = @transform_7, window_bounds = array<i64: 8, 896>}]} {
    %c0 = arith.constant 0 : index
    %c0_0 = arith.constant 0 : index
    %0 = vector.load %arg1[%c0, %c0_0] : memref<8x208xf32, #tpu.memory_space<vmem>>, vector<8x208xf32>
    %1 = arith.truncf %0 : vector<8x208xf32> to vector<8x208xbf16>
    %c0_1 = arith.constant 0 : index
    %c0_2 = arith.constant 0 : index
    %2 = vector.load %arg2[%c0_1, %c0_2] : memref<208x400xbf16, #tpu.memory_space<vmem>>, vector<208x400xbf16>
    %cst = arith.constant dense<0.000000e+00> : vector<8x400xf32>
    %3 = tpu.matmul %1, %2, %cst {dimension_numbers = #tpu.dot_dimension_numbers<[1], [0], [0], [1], [0, 0, 1, 1], [], []>} : vector<8x208xbf16>, vector<208x400xbf16>, vector<8x400xf32> -> vector<8x400xf32>
    %c0_3 = arith.constant 0 : index
    %c0_4 = arith.constant 0 : index
    %4 = vector.load %arg3[%c0_3, %c0_4] : memref<1x400xf32, #tpu.memory_space<vmem>>, vector<1x400xf32>
    %5 = vector.broadcast %4 : vector<1x400xf32> to vector<8x400xf32>
    %6 = arith.addf %3, %5 : vector<8x400xf32>
    %cst_5 = arith.constant 0.000000e+00 : f32
    %7 = vector.broadcast %cst_5 : f32 to vector<8x400xf32>
    %8 = arith.cmpf ogt, %6, %7 : vector<8x400xf32>
    %cst_6 = arith.constant 2.000000e-01 : f32
    %9 = vector.broadcast %cst_6 : f32 to vector<8x400xf32>
    %10 = arith.mulf %9, %6 : vector<8x400xf32>
    %11 = arith.select %8, %6, %10 : vector<8x400xi1>, vector<8x400xf32>
    %12 = arith.truncf %11 : vector<8x400xf32> to vector<8x400xbf16>
    %c0_7 = arith.constant 0 : index
    %c0_8 = arith.constant 0 : index
    %13 = vector.load %arg4[%c0_7, %c0_8] : memref<400x400xbf16, #tpu.memory_space<vmem>>, vector<400x400xbf16>
    %cst_9 = arith.constant dense<0.000000e+00> : vector<8x400xf32>
    %14 = tpu.matmul %12, %13, %cst_9 {dimension_numbers = #tpu.dot_dimension_numbers<[1], [0], [0], [1], [0, 0, 1, 1], [], []>} : vector<8x400xbf16>, vector<400x400xbf16>, vector<8x400xf32> -> vector<8x400xf32>
    %c0_10 = arith.constant 0 : index
    %c0_11 = arith.constant 0 : index
    %15 = vector.load %arg5[%c0_10, %c0_11] : memref<1x400xf32, #tpu.memory_space<vmem>>, vector<1x400xf32>
    %16 = vector.broadcast %15 : vector<1x400xf32> to vector<8x400xf32>
    %17 = arith.addf %14, %16 : vector<8x400xf32>
    %cst_12 = arith.constant 0.000000e+00 : f32
    %18 = vector.broadcast %cst_12 : f32 to vector<8x400xf32>
    %19 = arith.cmpf ogt, %17, %18 : vector<8x400xf32>
    %cst_13 = arith.constant 2.000000e-01 : f32
    %20 = vector.broadcast %cst_13 : f32 to vector<8x400xf32>
    %21 = arith.mulf %20, %17 : vector<8x400xf32>
    %22 = arith.select %19, %17, %21 : vector<8x400xi1>, vector<8x400xf32>
    %23 = arith.truncf %22 : vector<8x400xf32> to vector<8x400xbf16>
    %c0_14 = arith.constant 0 : index
    %c0_15 = arith.constant 0 : index
    %24 = vector.load %arg6[%c0_14, %c0_15] : memref<400x896xbf16, #tpu.memory_space<vmem>>, vector<400x896xbf16>
    %cst_16 = arith.constant dense<0.000000e+00> : vector<8x896xf32>
    %25 = tpu.matmul %23, %24, %cst_16 {dimension_numbers = #tpu.dot_dimension_numbers<[1], [0], [0], [1], [0, 0, 1, 1], [], []>} : vector<8x400xbf16>, vector<400x896xbf16>, vector<8x896xf32> -> vector<8x896xf32>
    %c0_17 = arith.constant 0 : index
    %c0_18 = arith.constant 0 : index
    %26 = vector.load %arg7[%c0_17, %c0_18] : memref<1x896xf32, #tpu.memory_space<vmem>>, vector<1x896xf32>
    %27 = vector.broadcast %26 : vector<1x896xf32> to vector<8x896xf32>
    %28 = arith.addf %25, %27 : vector<8x896xf32>
    %29 = arith.negf %28 : vector<8x896xf32>
    %30 = math.exp %29 : vector<8x896xf32>
    %cst_19 = arith.constant 1.000000e+00 : f32
    %31 = vector.broadcast %cst_19 : f32 to vector<8x896xf32>
    %32 = arith.addf %31, %30 : vector<8x896xf32>
    %33 = arith.divf %31, %32 : vector<8x896xf32>
    %c0_20 = arith.constant 0 : index
    %c0_21 = arith.constant 0 : index
    %34 = vector.load %arg8[%c0_20, %c0_21] : memref<8x896xf32, #tpu.memory_space<vmem>>, vector<8x896xf32>
    tpu.vector_store %arg8[%c0_20, %c0_21], %33 {strides = array<i32>} : memref<8x896xf32, #tpu.memory_space<vmem>>, vector<8x896xf32>,
    return
  }
  func.func @transform_0(%arg0: i32) -> (i32, i32) {
    %c0_i32 = arith.constant 0 : i32
    %c0_i32_0 = arith.constant 0 : i32
    return %arg0, %c0_i32 : i32, i32
  }
  func.func @transform_1(%arg0: i32) -> (i32, i32) {
    %c0_i32 = arith.constant 0 : i32
    %c0_i32_0 = arith.constant 0 : i32
    %c0_i32_1 = arith.constant 0 : i32
    return %c0_i32, %c0_i32_0 : i32, i32
  }
  func.func @transform_2(%arg0: i32) -> (i32, i32) {
    %c0_i32 = arith.constant 0 : i32
    %c0_i32_0 = arith.constant 0 : i32
    %c0_i32_1 = arith.constant 0 : i32
    return %c0_i32, %c0_i32_0 : i32, i32
  }
  func.func @transform_3(%arg0: i32) -> (i32, i32) {
    %c0_i32 = arith.constant 0 : i32
    %c0_i32_0 = arith.constant 0 : i32
    %c0_i32_1 = arith.constant 0 : i32
    return %c0_i32, %c0_i32_0 : i32, i32
  }
  func.func @transform_4(%arg0: i32) -> (i32, i32) {
    %c0_i32 = arith.constant 0 : i32
    %c0_i32_0 = arith.constant 0 : i32
    %c0_i32_1 = arith.constant 0 : i32
    return %c0_i32, %c0_i32_0 : i32, i32
  }
  func.func @transform_5(%arg0: i32) -> (i32, i32) {
    %c0_i32 = arith.constant 0 : i32
    %c0_i32_0 = arith.constant 0 : i32
    %c0_i32_1 = arith.constant 0 : i32
    return %c0_i32, %c0_i32_0 : i32, i32
  }
  func.func @transform_6(%arg0: i32) -> (i32, i32) {
    %c0_i32 = arith.constant 0 : i32
    %c0_i32_0 = arith.constant 0 : i32
    %c0_i32_1 = arith.constant 0 : i32
    return %c0_i32, %c0_i32_0 : i32, i32
  }
  func.func @transform_7(%arg0: i32) -> (i32, i32) {
    %c0_i32 = arith.constant 0 : i32
    %c0_i32_0 = arith.constant 0 : i32
    return %arg0, %c0_i32 : i32, i32
  }
}

</mosaic_0001>

<llo_original>
// kernel: decoder_forward.1
$region0: #{decoder_forward.1}
  #allocation0 [shape = 'u32[]', space=smem, size = 0x4, offset = 0x4, fixed_abs, tag = 'smem constant byte address 0x4 - core index']
  #allocation1 [shape = 'u32[144,128]{1,0:T(1,128)}', space=vmem, size = 0x12000, scoped, tag = 'internal scratch']
  %s0 = inlined_call_operand.vmem [shape: f32[8,208], index: 0, kind: input, shape index: {}]
  %s1 = inlined_call_operand.vmem [shape: bf16[208,400], index: 1, kind: input, shape index: {}]
  %s2 = inlined_call_operand.vmem [shape: f32[1,400], index: 2, kind: input, shape index: {}]
  %s3 = inlined_call_operand.vmem [shape: bf16[400,400], index: 3, kind: input, shape index: {}]
  %s4 = inlined_call_operand.vmem [shape: f32[1,400], index: 4, kind: input, shape index: {}]
  %s5 = inlined_call_operand.hbm [shape: bf16[400,896], index: 5, kind: input, shape index: {}]
  %s6 = inlined_call_operand.vmem [shape: f32[1,896], index: 6, kind: input, shape index: {}]
  %s7 = inlined_call_operand.hbm [shape: f32[8,896], index: 7, kind: output, shape index: {}]
  %s8 = sld [smem:[#allocation0]]
  $region42: #{decoder_forward.1} parent=0
    _
  %s10 = ssub.s32 1, %s8
  %s11 = scalar_select 0, %s10, %s8
  $region1: #{decoder_forward.1} parent=0
    #allocation2 [shape = 'u8[716800]{0}', space=vmem, size = 0xaf000, scoped, tag = 'input window, operand 5, single buffered']
    #allocation3 [shape = 's32[1]{0}', space=sflag, size = 0x4, scoped, tag = 'scoped memory for decoder_forward.1']
    #allocation4 [shape = 's32[1]{0}', space=sflag, size = 0x4, scoped, tag = 'scoped memory for decoder_forward.1']
    #allocation5 [shape = 'u8[28672]{0}', space=vmem, size = 0x7000, scoped, tag = 'output window, operand 0, single buffered']
    %12 = vsyncpa [#allocation3], 0
    %13 = vsyncpa [#allocation4], 0
    // Predicated region
    $region2: #{decoder_forward.1} parent=1 // pred_check
      _
    $region3: #{decoder_forward.1} parent=1 // pred_check_branch
      %15 = sbr.rel (0) target = $region5
    $region4: #{decoder_forward.1} parent=1 // pred_region
      _
    $region5: #{decoder_forward.1} parent=1 // pred_fallthru
      _
    // Predicated region
    $region6: #{decoder_forward.1} parent=1 // pred_check
      _
    $region7: #{decoder_forward.1} parent=1 // pred_check_branch
      %17 = sbr.rel (0) target = $region9
    $region8: #{decoder_forward.1} parent=1 // pred_region
      _
    $region9: #{decoder_forward.1} parent=1 // pred_fallthru
      _
    // Predicated region
    $region10: #{decoder_forward.1} parent=1 // pred_check
      _
    $region11: #{decoder_forward.1} parent=1 // pred_check_branch
      %19 = sbr.rel (0) target = $region13
    $region12: #{decoder_forward.1} parent=1 // pred_region
      _
    $region13: #{decoder_forward.1} parent=1 // pred_fallthru
      _
    // Predicated region
    $region14: #{decoder_forward.1} parent=1 // pred_check
      _
    $region15: #{decoder_forward.1} parent=1 // pred_check_branch
      %21 = sbr.rel (0) target = $region17
    $region16: #{decoder_forward.1} parent=1 // pred_region
      _
    $region17: #{decoder_forward.1} parent=1 // pred_fallthru
      _
    // Predicated region
    $region18: #{decoder_forward.1} parent=1 // pred_check
      _
    $region19: #{decoder_forward.1} parent=1 // pred_check_branch
      %23 = sbr.rel (0) target = $region21
    $region20: #{decoder_forward.1} parent=1 // pred_region
      _
    $region21: #{decoder_forward.1} parent=1 // pred_fallthru
      _
    // Predicated region
    $region22: #{decoder_forward.1} parent=1 // pred_check
      _
    $region23: #{decoder_forward.1} parent=1 // pred_check_branch
      %25 = sbr.rel (0) target = $region25
    $region24: #{decoder_forward.1} parent=1 // pred_region
      %s27 = ssub.s32 22400, 22400
      %28 = vsyncadd [#allocation3], %s27
      %s29 = sshll.u32 [#allocation2], 4
      %s30 = int_to_ptr.vmem [resolvable:$true] %s29
      %35 = dma.hbm_to_vmem [thread:$0]  %s5, 22400, %s30, [#allocation3], 448, 448, 28
    $region25: #{decoder_forward.1} parent=1 // pred_fallthru
      _
    // Predicated region
    $region26: #{decoder_forward.1} parent=1 // pred_check
      _
    $region27: #{decoder_forward.1} parent=1 // pred_check_branch
      %37 = sbr.rel (0) target = $region29
    $region28: #{decoder_forward.1} parent=1 // pred_region
      _
    $region29: #{decoder_forward.1} parent=1 // pred_fallthru
      _
    // Predicated region
    $region30: #{decoder_forward.1} parent=1 // pred_check
      _
    $region31: #{decoder_forward.1} parent=1 // pred_check_branch
      %39 = sbr.rel (0) target = $region33
    $region32: #{decoder_forward.1} parent=1 // pred_region
      %40 = dma.done [#allocation3], 22400
    $region33: #{decoder_forward.1} parent=1 // pred_fallthru
      _
    %v42 = vld [vmem:[%s0] sm:$0xff]
    %v43 = vld [vmem:[%s0 + $0x8] sm:$0xff]
    %v44 = vpack.c.bf16 %v42, %v42
    %v45 = vpack.c.bf16 %v43, %v43
    %v46 = vld [vmem:[%s1] sm:$0xff]
    %v47 = vld [vmem:[%s1 + $0x8] sm:$0xff]
    %v48 = vld [vmem:[%s1 + $0x10] sm:$0xff]
    %v49 = vld [vmem:[%s1 + $0x18] sm:$0xff]
    %v50 = vld [vmem:[%s1 + $0x20] sm:$0xff]
    %v51 = vld [vmem:[%s1 + $0x28] sm:$0xff]
    %v52 = vld [vmem:[%s1 + $0x30] sm:$0xff]
    %v53 = vld [vmem:[%s1 + $0x38] sm:$0xff]
    %v54 = vld [vmem:[%s1 + $0x40] sm:$0xff]
    %v55 = vld [vmem:[%s1 + $0x48] sm:$0xff]
    %v56 = vld [vmem:[%s1 + $0x50] sm:$0xff]
    %v57 = vld [vmem:[%s1 + $0x58] sm:$0xff]
    %v58 = vld [vmem:[%s1 + $0x60] sm:$0xff]
    %v59 = vld [vmem:[%s1 + $0x68] sm:$0xff]
    %v60 = vld [vmem:[%s1 + $0x70] sm:$0xff]
    %v61 = vld [vmem:[%s1 + $0x78] sm:$0xff]
    %v62 = vld [vmem:[%s1 + $0x80] sm:$0xff]
    %v63 = vld [vmem:[%s1 + $0x88] sm:$0xff]
    %v64 = vld [vmem:[%s1 + $0x90] sm:$0xff]
    %v65 = vld [vmem:[%s1 + $0x98] sm:$0xff]
    %v66 = vld [vmem:[%s1 + $0xa0] sm:$0xff]
    %v67 = vld [vmem:[%s1 + $0xa8] sm:$0xff]
    %v68 = vld [vmem:[%s1 + $0xb0] sm:$0xff]
    %v69 = vld [vmem:[%s1 + $0xb8] sm:$0xff]
    %v70 = vld [vmem:[%s1 + $0xc0] sm:$0xff]
    %v71 = vld [vmem:[%s1 + $0xc8] sm:$0xff]
    %v72 = vld [vmem:[%s1 + $0xd0] sm:$0xff]
    %v73 = vld [vmem:[%s1 + $0xd8] sm:$0xff]
    %v74 = vld [vmem:[%s1 + $0xe0] sm:$0xff]
    %v75 = vld [vmem:[%s1 + $0xe8] sm:$0xff]
    %v76 = vld [vmem:[%s1 + $0xf0] sm:$0xff]
    %v77 = vld [vmem:[%s1 + $0xf8] sm:$0xff]
    %v78 = vld [vmem:[%s1 + $0x100] sm:$0xff]
    %v79 = vld [vmem:[%s1 + $0x108] sm:$0xff]
    %v80 = vld [vmem:[%s1 + $0x110] sm:$0xff]
    %v81 = vld [vmem:[%s1 + $0x118] sm:$0xff]
    %v82 = vld [vmem:[%s1 + $0x120] sm:$0xff]
    %v83 = vld [vmem:[%s1 + $0x128] sm:$0xff]
    %v84 = vld [vmem:[%s1 + $0x130] sm:$0xff]
    %v85 = vld [vmem:[%s1 + $0x138] sm:$0xff]
    %v86 = vld [vmem:[%s1 + $0x140] sm:$0xff]
    %v87 = vld [vmem:[%s1 + $0x148] sm:$0xff]
    %v88 = vld [vmem:[%s1 + $0x150] sm:$0xff]
    %v89 = vld [vmem:[%s1 + $0x158] sm:$0xff]
    %v90 = vld [vmem:[%s1 + $0x160] sm:$0xff]
    %v91 = vld [vmem:[%s1 + $0x168] sm:$0xff]
    %v92 = vld [vmem:[%s1 + $0x170] sm:$0xff]
    %v93 = vld [vmem:[%s1 + $0x178] sm:$0xff]
    %v94 = vld [vmem:[%s1 + $0x180] sm:$0xff]
    %v95 = vld [vmem:[%s1 + $0x188] sm:$0xff]
    %v96 = vld [vmem:[%s1 + $0x190] sm:$0xff]
    %v97 = vld [vmem:[%s1 + $0x198] sm:$0xff]
    %v98 = vld [vmem:[%s2] sm:$0xf]
    %v100 = vlaneseq
    %v101 = vshrl.u32 %v100, 7
    %v102 = vsub.s32 0, %v101
    %v103 = vrot.slane %v98, %v102
    %v104 = vlaneseq
    %v105 = vshrl.u32 %v104, 7
    %v106 = vsub.s32 1, %v105
    %v107 = vrot.slane %v98, %v106
    %v108 = vlaneseq
    %v109 = vshrl.u32 %v108, 7
    %v110 = vsub.s32 2, %v109
    %v111 = vrot.slane %v98, %v110
    %v112 = vlaneseq
    %v113 = vshrl.u32 %v112, 7
    %v114 = vsub.s32 3, %v113
    %v115 = vrot.slane %v98, %v114
    %v172 = vunpack.c.l.b16 %v46
    %v173 = vunpack.c.h.b16 %v46
    %v174 = vunpack.c.l.b16 %v47
    %v175 = vunpack.c.h.b16 %v47
    %v176 = vunpack.c.l.b16 %v48
    %v177 = vunpack.c.h.b16 %v48
    %v178 = vunpack.c.l.b16 %v49
    %v179 = vunpack.c.h.b16 %v49
    %v180 = vunpack.c.l.b16 %v50
    %v181 = vunpack.c.h.b16 %v50
    %v182 = vunpack.c.l.b16 %v51
    %v183 = vunpack.c.h.b16 %v51
    %v184 = vunpack.c.l.b16 %v52
    %v185 = vunpack.c.h.b16 %v52
    %v186 = vunpack.c.l.b16 %v53
    %v187 = vunpack.c.h.b16 %v53
    %v188 = vunpack.c.l.b16 %v54
    %v189 = vunpack.c.h.b16 %v54
    %v190 = vunpack.c.l.b16 %v55
    %v191 = vunpack.c.h.b16 %v55
    %v192 = vunpack.c.l.b16 %v56
    %v193 = vunpack.c.h.b16 %v56
    %v194 = vunpack.c.l.b16 %v57
    %v195 = vunpack.c.h.b16 %v57
    %v196 = vunpack.c.l.b16 %v58
    %v197 = vunpack.c.h.b16 %v58
    %v198 = vunpack.c.l.b16 %v59
    %v199 = vunpack.c.h.b16 %v59
    %v200 = vunpack.c.l.b16 %v60
    %v201 = vunpack.c.h.b16 %v60
    %v202 = vunpack.c.l.b16 %v61
    %v203 = vunpack.c.h.b16 %v61
    %v204 = vunpack.c.l.b16 %v62
    %v205 = vunpack.c.h.b16 %v62
    %v206 = vunpack.c.l.b16 %v63
    %v207 = vunpack.c.h.b16 %v63
    %v208 = vunpack.c.l.b16 %v64
    %v209 = vunpack.c.h.b16 %v64
    %v210 = vunpack.c.l.b16 %v65
    %v211 = vunpack.c.h.b16 %v65
    %v212 = vunpack.c.l.b16 %v66
    %v213 = vunpack.c.h.b16 %v66
    %v214 = vunpack.c.l.b16 %v67
    %v215 = vunpack.c.h.b16 %v67
    %v216 = vunpack.c.l.b16 %v68
    %v217 = vunpack.c.h.b16 %v68
    %v218 = vunpack.c.l.b16 %v69
    %v219 = vunpack.c.h.b16 %v69
    %v220 = vunpack.c.l.b16 %v70
    %v221 = vunpack.c.h.b16 %v70
    %v222 = vunpack.c.l.b16 %v71
    %v223 = vunpack.c.h.b16 %v71
    %v224 = vunpack.c.l.b16 %v72
    %v225 = vunpack.c.h.b16 %v72
    %v226 = vunpack.c.l.b16 %v73
    %v227 = vunpack.c.h.b16 %v73
    %v228 = vunpack.c.l.b16 %v74
    %v229 = vunpack.c.h.b16 %v74
    %v230 = vunpack.c.l.b16 %v75
    %v231 = vunpack.c.h.b16 %v75
    %v232 = vunpack.c.l.b16 %v76
    %v233 = vunpack.c.h.b16 %v76
    %v234 = vunpack.c.l.b16 %v77
    %v235 = vunpack.c.h.b16 %v77
    %v236 = vunpack.c.l.b16 %v78
    %v237 = vunpack.c.h.b16 %v78
    %v238 = vunpack.c.l.b16 %v79
    %v239 = vunpack.c.h.b16 %v79
    %v240 = vunpack.c.l.b16 %v80
    %v241 = vunpack.c.h.b16 %v80
    %v242 = vunpack.c.l.b16 %v81
    %v243 = vunpack.c.h.b16 %v81
    %v244 = vunpack.c.l.b16 %v82
    %v245 = vunpack.c.h.b16 %v82
    %v246 = vunpack.c.l.b16 %v83
    %v247 = vunpack.c.h.b16 %v83
    %v248 = vunpack.c.l.b16 %v84
    %v249 = vunpack.c.h.b16 %v84
    %v250 = vunpack.c.l.b16 %v85
    %v251 = vunpack.c.h.b16 %v85
    %v252 = vunpack.c.l.b16 %v86
    %v253 = vunpack.c.h.b16 %v86
    %v254 = vunpack.c.l.b16 %v87
    %v255 = vunpack.c.h.b16 %v87
    %v256 = vunpack.c.l.b16 %v88
    %v257 = vunpack.c.h.b16 %v88
    %v258 = vunpack.c.l.b16 %v89
    %v259 = vunpack.c.h.b16 %v89
    %v260 = vunpack.c.l.b16 %v90
    %v261 = vunpack.c.h.b16 %v90
    %v262 = vunpack.c.l.b16 %v91
    %v263 = vunpack.c.h.b16 %v91
    %v264 = vunpack.c.l.b16 %v92
    %v265 = vunpack.c.h.b16 %v92
    %v266 = vunpack.c.l.b16 %v93
    %v267 = vunpack.c.h.b16 %v93
    %v268 = vunpack.c.l.b16 %v94
    %v269 = vunpack.c.h.b16 %v94
    %v270 = vunpack.c.l.b16 %v95
    %v271 = vunpack.c.h.b16 %v95
    %v272 = vunpack.c.l.b16 %v96
    %v273 = vunpack.c.h.b16 %v96
    %v274 = vunpack.c.l.b16 %v97
    %v275 = vunpack.c.h.b16 %v97
    %v276 = vpack.c.b16 %v176, %v172
    %v277 = vpack.c.b16 %v177, %v173
    %v278 = vpack.c.b16 %v178, %v174
    %v279 = vpack.c.b16 %v179, %v175
    %v280 = vpack.c.b16 %v184, %v180
    %v281 = vpack.c.b16 %v185, %v181
    %v282 = vpack.c.b16 %v186, %v182
    %v283 = vpack.c.b16 %v187, %v183
    %v284 = vpack.c.b16 %v192, %v188
    %v285 = vpack.c.b16 %v193, %v189
    %v286 = vpack.c.b16 %v194, %v190
    %v287 = vpack.c.b16 %v195, %v191
    %v288 = vpack.c.b16 %v200, %v196
    %v289 = vpack.c.b16 %v201, %v197
    %v290 = vpack.c.b16 %v202, %v198
    %v291 = vpack.c.b16 %v203, %v199
    %v292 = vpack.c.b16 %v208, %v204
    %v293 = vpack.c.b16 %v209, %v205
    %v294 = vpack.c.b16 %v210, %v206
    %v295 = vpack.c.b16 %v211, %v207
    %v296 = vpack.c.b16 %v216, %v212
    %v297 = vpack.c.b16 %v217, %v213
    %v298 = vpack.c.b16 %v218, %v214
    %v299 = vpack.c.b16 %v219, %v215
    %v300 = vpack.c.b16 %v224, %v220
    %v301 = vpack.c.b16 %v225, %v221
    %v302 = vpack.c.b16 %v226, %v222
    %v303 = vpack.c.b16 %v227, %v223
    %v304 = vpack.c.b16 %v232, %v228
    %v305 = vpack.c.b16 %v233, %v229
    %v306 = vpack.c.b16 %v234, %v230
    %v307 = vpack.c.b16 %v235, %v231
    %v308 = vpack.c.b16 %v240, %v236
    %v309 = vpack.c.b16 %v241, %v237
    %v310 = vpack.c.b16 %v242, %v238
    %v311 = vpack.c.b16 %v243, %v239
    %v312 = vpack.c.b16 %v248, %v244
    %v313 = vpack.c.b16 %v249, %v245
    %v314 = vpack.c.b16 %v250, %v246
    %v315 = vpack.c.b16 %v251, %v247
    %v316 = vpack.c.b16 %v256, %v252
    %v317 = vpack.c.b16 %v257, %v253
    %v318 = vpack.c.b16 %v258, %v254
    %v319 = vpack.c.b16 %v259, %v255
    %v320 = vpack.c.b16 %v264, %v260
    %v321 = vpack.c.b16 %v265, %v261
    %v322 = vpack.c.b16 %v266, %v262
    %v323 = vpack.c.b16 %v267, %v263
    %v324 = vpack.c.b16 %v272, %v268
    %v325 = vpack.c.b16 %v273, %v269
    %v326 = vpack.c.b16 %v274, %v270
    %v327 = vpack.c.b16 %v275, %v271
    %vm380 = vcmask 654336
    %v382 = vsel %vm380, %v45, 0
    %384 = vmatprep.subr.bf16.mxu0 %v305
    %385 = vmatpush1.bf16.msra.mxu0 %v304
    %386 = vmatprep.subr.bf16.mxu0 %v301
    %387 = vmatpush1.bf16.msra.mxu0 %v300
    %388 = vmatprep.subr.bf16.mxu0 %v297
    %389 = vmatpush1.bf16.msra.mxu0 %v296
    %390 = vmatprep.subr.bf16.mxu0 %v293
    %391 = vmatpush1.bf16.msra.mxu0 %v292
    %392 = vmatprep.subr.bf16.mxu0 %v289
    %393 = vmatpush1.bf16.msra.mxu0 %v288
    %394 = vmatprep.subr.bf16.mxu0 %v285
    %395 = vmatpush1.bf16.msra.mxu0 %v284
    %396 = vmatprep.subr.bf16.mxu0 %v281
    %397 = vmatpush1.bf16.msra.mxu0 %v280
    %398 = vmatprep.subr.bf16.mxu0 %v277
    %399 = vmatpush1.bf16.msra.mxu0 %v276
    %400 = vmatprep.subr.bf16.mxu0 0
    %401 = vmatpush2.bf16.msra.mxu0 0
    %402 = vmatprep.subr.bf16.mxu0 0
    %403 = vmatpush2.bf16.msra.mxu0 0
    %404 = vmatprep.subr.bf16.mxu0 0
    %405 = vmatpush2.bf16.msra.mxu0 0
    %406 = vmatprep.subr.bf16.mxu0 %v325
    %407 = vmatpush2.bf16.msra.mxu0 %v324
    %408 = vmatprep.subr.bf16.mxu0 %v321
    %409 = vmatpush2.bf16.msra.mxu0 %v320
    %410 = vmatprep.subr.bf16.mxu0 %v317
    %411 = vmatpush2.bf16.msra.mxu0 %v316
    %412 = vmatprep.subr.bf16.mxu0 %v313
    %413 = vmatpush2.bf16.msra.mxu0 %v312
    %414 = vmatprep.subr.bf16.mxu0 %v309
    %415 = vmatpush2.bf16.msra.mxu0 %v308
    %416 = vmatprep.mubr.bf16.mxu0 %v382
    %417 = vmatmul.mubr.bf16.gmra.mxu0 %v44
    %v418 = vpop.f32.mrf.mxu0
    %v419 = vadd.f32 %v103, %v418
    %v420 = vpop.f32.mrf.mxu0
    %v421 = vadd.f32 %v107, %v420
    %v422 = vpop.f32.mrf.mxu0
    %v423 = vpop.f32.mrf.mxu0
    %424 = vdwg.mxu0
    %425 = vmatprep.subr.bf16.mxu0 %v307
    %426 = vmatpush1.bf16.msra.mxu0 %v306
    %427 = vmatprep.subr.bf16.mxu0 %v303
    %428 = vmatpush1.bf16.msra.mxu0 %v302
    %429 = vmatprep.subr.bf16.mxu0 %v299
    %430 = vmatpush1.bf16.msra.mxu0 %v298
    %431 = vmatprep.subr.bf16.mxu0 %v295
    %432 = vmatpush1.bf16.msra.mxu0 %v294
    %433 = vmatprep.subr.bf16.mxu0 %v291
    %434 = vmatpush1.bf16.msra.mxu0 %v290
    %435 = vmatprep.subr.bf16.mxu0 %v287
    %436 = vmatpush1.bf16.msra.mxu0 %v286
    %437 = vmatprep.subr.bf16.mxu0 %v283
    %438 = vmatpush1.bf16.msra.mxu0 %v282
    %439 = vmatprep.subr.bf16.mxu0 %v279
    %440 = vmatpush1.bf16.msra.mxu0 %v278
    %441 = vmatprep.subr.bf16.mxu0 0
    %442 = vmatpush2.bf16.msra.mxu0 0
    %443 = vmatprep.subr.bf16.mxu0 0
    %444 = vmatpush2.bf16.msra.mxu0 0
    %445 = vmatprep.subr.bf16.mxu0 0
    %446 = vmatpush2.bf16.msra.mxu0 0
    %447 = vmatprep.subr.bf16.mxu0 %v327
    %448 = vmatpush2.bf16.msra.mxu0 %v326
    %449 = vmatprep.subr.bf16.mxu0 %v323
    %450 = vmatpush2.bf16.msra.mxu0 %v322
    %451 = vmatprep.subr.bf16.mxu0 %v319
    %452 = vmatpush2.bf16.msra.mxu0 %v318
    %453 = vmatprep.subr.bf16.mxu0 %v315
    %454 = vmatpush2.bf16.msra.mxu0 %v314
    %455 = vmatprep.subr.bf16.mxu0 %v311
    %456 = vmatpush2.bf16.msra.mxu0 %v310
    %457 = vmatprep.mubr.bf16.mxu0 %v382
    %458 = vmatmul.mubr.bf16.gmra.mxu0 %v44
    %v459 = vpop.f32.mrf.mxu0
    %v460 = vadd.f32 %v111, %v459
    %v461 = vpop.f32.mrf.mxu0
    %v462 = vadd.f32 %v115, %v461
    %v463 = vpop.f32.mrf.mxu0
    %v464 = vpop.f32.mrf.mxu0
    %465 = vdwg.mxu0
    %vm466 = vcmp.gt.f32.partialorder %v419, 0.0
    %vm467 = vcmp.gt.f32.partialorder %v421, 0.0
    %vm468 = vcmp.gt.f32.partialorder %v460, 0.0
    %vm469 = vcmp.gt.f32.partialorder %v462, 0.0
    %v470 = vmul.f32 %v419, 0.2
    %v471 = vmul.f32 %v421, 0.2
    %v472 = vmul.f32 %v460, 0.2
    %v473 = vmul.f32 %v462, 0.2
    %v474 = vsel %vm466, %v419, %v470
    %v475 = vsel %vm467, %v421, %v471
    %v476 = vsel %vm468, %v460, %v472
    %v477 = vsel %vm469, %v462, %v473
    %v478 = vpack.c.bf16 %v474, %v474
    %v479 = vpack.c.bf16 %v475, %v475
    %v480 = vpack.c.bf16 %v476, %v476
    %v481 = vpack.c.bf16 %v477, %v477
    %v482 = vld [vmem:[%s3] sm:$0xff]
    %v483 = vld [vmem:[%s3 + $0x8] sm:$0xff]
    %v484 = vld [vmem:[%s3 + $0x10] sm:$0xff]
    %v485 = vld [vmem:[%s3 + $0x18] sm:$0xff]
    %v486 = vld [vmem:[%s3 + $0x20] sm:$0xff]
    %v487 = vld [vmem:[%s3 + $0x28] sm:$0xff]
    %v488 = vld [vmem:[%s3 + $0x30] sm:$0xff]
    %v489 = vld [vmem:[%s3 + $0x38] sm:$0xff]
    %v490 = vld [vmem:[%s3 + $0x40] sm:$0xff]
    %v491 = vld [vmem:[%s3 + $0x48] sm:$0xff]
    %v492 = vld [vmem:[%s3 + $0x50] sm:$0xff]
    %v493 = vld [vmem:[%s3 + $0x58] sm:$0xff]
    %v494 = vld [vmem:[%s3 + $0x60] sm:$0xff]
    %v495 = vld [vmem:[%s3 + $0x68] sm:$0xff]
    %v496 = vld [vmem:[%s3 + $0x70] sm:$0xff]
    %v497 = vld [vmem:[%s3 + $0x78] sm:$0xff]
    %v498 = vld [vmem:[%s3 + $0x80] sm:$0xff]
    %v499 = vld [vmem:[%s3 + $0x88] sm:$0xff]
    %v500 = vld [vmem:[%s3 + $0x90] sm:$0xff]
    %v501 = vld [vmem:[%s3 + $0x98] sm:$0xff]
    %v502 = vld [vmem:[%s3 + $0xa0] sm:$0xff]
    %v503 = vld [vmem:[%s3 + $0xa8] sm:$0xff]
    %v504 = vld [vmem:[%s3 + $0xb0] sm:$0xff]
    %v505 = vld [vmem:[%s3 + $0xb8] sm:$0xff]
    %v506 = vld [vmem:[%s3 + $0xc0] sm:$0xff]
    %v507 = vld [vmem:[%s3 + $0xc8] sm:$0xff]
    %v508 = vld [vmem:[%s3 + $0xd0] sm:$0xff]
    %v509 = vld [vmem:[%s3 + $0xd8] sm:$0xff]
    %v510 = vld [vmem:[%s3 + $0xe0] sm:$0xff]
    %v511 = vld [vmem:[%s3 + $0xe8] sm:$0xff]
    %v512 = vld [vmem:[%s3 + $0xf0] sm:$0xff]
    %v513 = vld [vmem:[%s3 + $0xf8] sm:$0xff]
    %v514 = vld [vmem:[%s3 + $0x100] sm:$0xff]
    %v515 = vld [vmem:[%s3 + $0x108] sm:$0xff]
    %v516 = vld [vmem:[%s3 + $0x110] sm:$0xff]
    %v517 = vld [vmem:[%s3 + $0x118] sm:$0xff]
    %v518 = vld [vmem:[%s3 + $0x120] sm:$0xff]
    %v519 = vld [vmem:[%s3 + $0x128] sm:$0xff]
    %v520 = vld [vmem:[%s3 + $0x130] sm:$0xff]
    %v521 = vld [vmem:[%s3 + $0x138] sm:$0xff]
    %v522 = vld [vmem:[%s3 + $0x140] sm:$0xff]
    %v523 = vld [vmem:[%s3 + $0x148] sm:$0xff]
    %v524 = vld [vmem:[%s3 + $0x150] sm:$0xff]
    %v525 = vld [vmem:[%s3 + $0x158] sm:$0xff]
    %v526 = vld [vmem:[%s3 + $0x160] sm:$0xff]
    %v527 = vld [vmem:[%s3 + $0x168] sm:$0xff]
    %v528 = vld [vmem:[%s3 + $0x170] sm:$0xff]
    %v529 = vld [vmem:[%s3 + $0x178] sm:$0xff]
    %v530 = vld [vmem:[%s3 + $0x180] sm:$0xff]
    %v531 = vld [vmem:[%s3 + $0x188] sm:$0xff]
    %v532 = vld [vmem:[%s3 + $0x190] sm:$0xff]
    %v533 = vld [vmem:[%s3 + $0x198] sm:$0xff]
    %v534 = vld [vmem:[%s3 + $0x1a0] sm:$0xff]
    %v535 = vld [vmem:[%s3 + $0x1a8] sm:$0xff]
    %v536 = vld [vmem:[%s3 + $0x1b0] sm:$0xff]
    %v537 = vld [vmem:[%s3 + $0x1b8] sm:$0xff]
    %v538 = vld [vmem:[%s3 + $0x1c0] sm:$0xff]
    %v539 = vld [vmem:[%s3 + $0x1c8] sm:$0xff]
    %v540 = vld [vmem:[%s3 + $0x1d0] sm:$0xff]
    %v541 = vld [vmem:[%s3 + $0x1d8] sm:$0xff]
    %v542 = vld [vmem:[%s3 + $0x1e0] sm:$0xff]
    %v543 = vld [vmem:[%s3 + $0x1e8] sm:$0xff]
    %v544 = vld [vmem:[%s3 + $0x1f0] sm:$0xff]
    %v545 = vld [vmem:[%s3 + $0x1f8] sm:$0xff]
    %v546 = vld [vmem:[%s3 + $0x200] sm:$0xff]
    %v547 = vld [vmem:[%s3 + $0x208] sm:$0xff]
    %v548 = vld [vmem:[%s3 + $0x210] sm:$0xff]
    %v549 = vld [vmem:[%s3 + $0x218] sm:$0xff]
    %v550 = vld [vmem:[%s3 + $0x220] sm:$0xff]
    %v551 = vld [vmem:[%s3 + $0x228] sm:$0xff]
    %v552 = vld [vmem:[%s3 + $0x230] sm:$0xff]
    %v553 = vld [vmem:[%s3 + $0x238] sm:$0xff]
    %v554 = vld [vmem:[%s3 + $0x240] sm:$0xff]
    %v555 = vld [vmem:[%s3 + $0x248] sm:$0xff]
    %v556 = vld [vmem:[%s3 + $0x250] sm:$0xff]
    %v557 = vld [vmem:[%s3 + $0x258] sm:$0xff]
    %v558 = vld [vmem:[%s3 + $0x260] sm:$0xff]
    %v559 = vld [vmem:[%s3 + $0x268] sm:$0xff]
    %v560 = vld [vmem:[%s3 + $0x270] sm:$0xff]
    %v561 = vld [vmem:[%s3 + $0x278] sm:$0xff]
    %v562 = vld [vmem:[%s3 + $0x280] sm:$0xff]
    %v563 = vld [vmem:[%s3 + $0x288] sm:$0xff]
    %v564 = vld [vmem:[%s3 + $0x290] sm:$0xff]
    %v565 = vld [vmem:[%s3 + $0x298] sm:$0xff]
    %v566 = vld [vmem:[%s3 + $0x2a0] sm:$0xff]
    %v567 = vld [vmem:[%s3 + $0x2a8] sm:$0xff]
    %v568 = vld [vmem:[%s3 + $0x2b0] sm:$0xff]
    %v569 = vld [vmem:[%s3 + $0x2b8] sm:$0xff]
    %v570 = vld [vmem:[%s3 + $0x2c0] sm:$0xff]
    %v571 = vld [vmem:[%s3 + $0x2c8] sm:$0xff]
    %v572 = vld [vmem:[%s3 + $0x2d0] sm:$0xff]
    %v573 = vld [vmem:[%s3 + $0x2d8] sm:$0xff]
    %v574 = vld [vmem:[%s3 + $0x2e0] sm:$0xff]
    %v575 = vld [vmem:[%s3 + $0x2e8] sm:$0xff]
    %v576 = vld [vmem:[%s3 + $0x2f0] sm:$0xff]
    %v577 = vld [vmem:[%s3 + $0x2f8] sm:$0xff]
    %v578 = vld [vmem:[%s3 + $0x300] sm:$0xff]
    %v579 = vld [vmem:[%s3 + $0x308] sm:$0xff]
    %v580 = vld [vmem:[%s3 + $0x310] sm:$0xff]
    %v581 = vld [vmem:[%s3 + $0x318] sm:$0xff]
    %v582 = vld [vmem:[%s4] sm:$0xf]
    %v584 = vlaneseq
    %v585 = vshrl.u32 %v584, 7
    %v586 = vsub.s32 0, %v585
    %v587 = vrot.slane %v582, %v586
    %v588 = vlaneseq
    %v589 = vshrl.u32 %v588, 7
    %v590 = vsub.s32 1, %v589
    %v591 = vrot.slane %v582, %v590
    %v592 = vlaneseq
    %v593 = vshrl.u32 %v592, 7
    %v594 = vsub.s32 2, %v593
    %v595 = vrot.slane %v582, %v594
    %v596 = vlaneseq
    %v597 = vshrl.u32 %v596, 7
    %v598 = vsub.s32 3, %v597
    %v599 = vrot.slane %v582, %v598
    %v704 = vunpack.c.l.b16 %v482
    %v705 = vunpack.c.h.b16 %v482
    %v706 = vunpack.c.l.b16 %v483
    %v707 = vunpack.c.h.b16 %v483
    %v708 = vunpack.c.l.b16 %v484
    %v709 = vunpack.c.h.b16 %v484
    %v710 = vunpack.c.l.b16 %v485
    %v711 = vunpack.c.h.b16 %v485
    %v712 = vunpack.c.l.b16 %v486
    %v713 = vunpack.c.h.b16 %v486
    %v714 = vunpack.c.l.b16 %v487
    %v715 = vunpack.c.h.b16 %v487
    %v716 = vunpack.c.l.b16 %v488
    %v717 = vunpack.c.h.b16 %v488
    %v718 = vunpack.c.l.b16 %v489
    %v719 = vunpack.c.h.b16 %v489
    %v720 = vunpack.c.l.b16 %v490
    %v721 = vunpack.c.h.b16 %v490
    %v722 = vunpack.c.l.b16 %v491
    %v723 = vunpack.c.h.b16 %v491
    %v724 = vunpack.c.l.b16 %v492
    %v725 = vunpack.c.h.b16 %v492
    %v726 = vunpack.c.l.b16 %v493
    %v727 = vunpack.c.h.b16 %v493
    %v728 = vunpack.c.l.b16 %v494
    %v729 = vunpack.c.h.b16 %v494
    %v730 = vunpack.c.l.b16 %v495
    %v731 = vunpack.c.h.b16 %v495
    %v732 = vunpack.c.l.b16 %v496
    %v733 = vunpack.c.h.b16 %v496
    %v734 = vunpack.c.l.b16 %v497
    %v735 = vunpack.c.h.b16 %v497
    %v736 = vunpack.c.l.b16 %v498
    %v737 = vunpack.c.h.b16 %v498
    %v738 = vunpack.c.l.b16 %v499
    %v739 = vunpack.c.h.b16 %v499
    %v740 = vunpack.c.l.b16 %v500
    %v741 = vunpack.c.h.b16 %v500
    %v742 = vunpack.c.l.b16 %v501
    %v743 = vunpack.c.h.b16 %v501
    %v744 = vunpack.c.l.b16 %v502
    %v745 = vunpack.c.h.b16 %v502
    %v746 = vunpack.c.l.b16 %v503
    %v747 = vunpack.c.h.b16 %v503
    %v748 = vunpack.c.l.b16 %v504
    %v749 = vunpack.c.h.b16 %v504
    %v750 = vunpack.c.l.b16 %v505
    %v751 = vunpack.c.h.b16 %v505
    %v752 = vunpack.c.l.b16 %v506
    %v753 = vunpack.c.h.b16 %v506
    %v754 = vunpack.c.l.b16 %v507
    %v755 = vunpack.c.h.b16 %v507
    %v756 = vunpack.c.l.b16 %v508
    %v757 = vunpack.c.h.b16 %v508
    %v758 = vunpack.c.l.b16 %v509
    %v759 = vunpack.c.h.b16 %v509
    %v760 = vunpack.c.l.b16 %v510
    %v761 = vunpack.c.h.b16 %v510
    %v762 = vunpack.c.l.b16 %v511
    %v763 = vunpack.c.h.b16 %v511
    %v764 = vunpack.c.l.b16 %v512
    %v765 = vunpack.c.h.b16 %v512
    %v766 = vunpack.c.l.b16 %v513
    %v767 = vunpack.c.h.b16 %v513
    %v768 = vunpack.c.l.b16 %v514
    %v769 = vunpack.c.h.b16 %v514
    %v770 = vunpack.c.l.b16 %v515
    %v771 = vunpack.c.h.b16 %v515
    %v772 = vunpack.c.l.b16 %v516
    %v773 = vunpack.c.h.b16 %v516
    %v774 = vunpack.c.l.b16 %v517
    %v775 = vunpack.c.h.b16 %v517
    %v776 = vunpack.c.l.b16 %v518
    %v777 = vunpack.c.h.b16 %v518
    %v778 = vunpack.c.l.b16 %v519
    %v779 = vunpack.c.h.b16 %v519
    %v780 = vunpack.c.l.b16 %v520
    %v781 = vunpack.c.h.b16 %v520
    %v782 = vunpack.c.l.b16 %v521
    %v783 = vunpack.c.h.b16 %v521
    %v784 = vunpack.c.l.b16 %v522
    %v785 = vunpack.c.h.b16 %v522
    %v786 = vunpack.c.l.b16 %v523
    %v787 = vunpack.c.h.b16 %v523
    %v788 = vunpack.c.l.b16 %v524
    %v789 = vunpack.c.h.b16 %v524
    %v790 = vunpack.c.l.b16 %v525
    %v791 = vunpack.c.h.b16 %v525
    %v792 = vunpack.c.l.b16 %v526
    %v793 = vunpack.c.h.b16 %v526
    %v794 = vunpack.c.l.b16 %v527
    %v795 = vunpack.c.h.b16 %v527
    %v796 = vunpack.c.l.b16 %v528
    %v797 = vunpack.c.h.b16 %v528
    %v798 = vunpack.c.l.b16 %v529
    %v799 = vunpack.c.h.b16 %v529
    %v800 = vunpack.c.l.b16 %v530
    %v801 = vunpack.c.h.b16 %v530
    %v802 = vunpack.c.l.b16 %v531
    %v803 = vunpack.c.h.b16 %v531
    %v804 = vunpack.c.l.b16 %v532
    %v805 = vunpack.c.h.b16 %v532
    %v806 = vunpack.c.l.b16 %v533
    %v807 = vunpack.c.h.b16 %v533
    %v808 = vunpack.c.l.b16 %v534
    %v809 = vunpack.c.h.b16 %v534
    %v810 = vunpack.c.l.b16 %v535
    %v811 = vunpack.c.h.b16 %v535
    %v812 = vunpack.c.l.b16 %v536
    %v813 = vunpack.c.h.b16 %v536
    %v814 = vunpack.c.l.b16 %v537
    %v815 = vunpack.c.h.b16 %v537
    %v816 = vunpack.c.l.b16 %v538
    %v817 = vunpack.c.h.b16 %v538
    %v818 = vunpack.c.l.b16 %v539
    %v819 = vunpack.c.h.b16 %v539
    %v820 = vunpack.c.l.b16 %v540
    %v821 = vunpack.c.h.b16 %v540
    %v822 = vunpack.c.l.b16 %v541
    %v823 = vunpack.c.h.b16 %v541
    %v824 = vunpack.c.l.b16 %v542
    %v825 = vunpack.c.h.b16 %v542
    %v826 = vunpack.c.l.b16 %v543
    %v827 = vunpack.c.h.b16 %v543
    %v828 = vunpack.c.l.b16 %v544
    %v829 = vunpack.c.h.b16 %v544
    %v830 = vunpack.c.l.b16 %v545
    %v831 = vunpack.c.h.b16 %v545
    %v832 = vunpack.c.l.b16 %v546
    %v833 = vunpack.c.h.b16 %v546
    %v834 = vunpack.c.l.b16 %v547
    %v835 = vunpack.c.h.b16 %v547
    %v836 = vunpack.c.l.b16 %v548
    %v837 = vunpack.c.h.b16 %v548
    %v838 = vunpack.c.l.b16 %v549
    %v839 = vunpack.c.h.b16 %v549
    %v840 = vunpack.c.l.b16 %v550
    %v841 = vunpack.c.h.b16 %v550
    %v842 = vunpack.c.l.b16 %v551
    %v843 = vunpack.c.h.b16 %v551
    %v844 = vunpack.c.l.b16 %v552
    %v845 = vunpack.c.h.b16 %v552
    %v846 = vunpack.c.l.b16 %v553
    %v847 = vunpack.c.h.b16 %v553
    %v848 = vunpack.c.l.b16 %v554
    %v849 = vunpack.c.h.b16 %v554
    %v850 = vunpack.c.l.b16 %v555
    %v851 = vunpack.c.h.b16 %v555
    %v852 = vunpack.c.l.b16 %v556
    %v853 = vunpack.c.h.b16 %v556
    %v854 = vunpack.c.l.b16 %v557
    %v855 = vunpack.c.h.b16 %v557
    %v856 = vunpack.c.l.b16 %v558
    %v857 = vunpack.c.h.b16 %v558
    %v858 = vunpack.c.l.b16 %v559
    %v859 = vunpack.c.h.b16 %v559
    %v860 = vunpack.c.l.b16 %v560
    %v861 = vunpack.c.h.b16 %v560
    %v862 = vunpack.c.l.b16 %v561
    %v863 = vunpack.c.h.b16 %v561
    %v864 = vunpack.c.l.b16 %v562
    %v865 = vunpack.c.h.b16 %v562
    %v866 = vunpack.c.l.b16 %v563
    %v867 = vunpack.c.h.b16 %v563
    %v868 = vunpack.c.l.b16 %v564
    %v869 = vunpack.c.h.b16 %v564
    %v870 = vunpack.c.l.b16 %v565
    %v871 = vunpack.c.h.b16 %v565
    %v872 = vunpack.c.l.b16 %v566
    %v873 = vunpack.c.h.b16 %v566
    %v874 = vunpack.c.l.b16 %v567
    %v875 = vunpack.c.h.b16 %v567
    %v876 = vunpack.c.l.b16 %v568
    %v877 = vunpack.c.h.b16 %v568
    %v878 = vunpack.c.l.b16 %v569
    %v879 = vunpack.c.h.b16 %v569
    %v880 = vunpack.c.l.b16 %v570
    %v881 = vunpack.c.h.b16 %v570
    %v882 = vunpack.c.l.b16 %v571
    %v883 = vunpack.c.h.b16 %v571
    %v884 = vunpack.c.l.b16 %v572
    %v885 = vunpack.c.h.b16 %v572
    %v886 = vunpack.c.l.b16 %v573
    %v887 = vunpack.c.h.b16 %v573
    %v888 = vunpack.c.l.b16 %v574
    %v889 = vunpack.c.h.b16 %v574
    %v890 = vunpack.c.l.b16 %v575
    %v891 = vunpack.c.h.b16 %v575
    %v892 = vunpack.c.l.b16 %v576
    %v893 = vunpack.c.h.b16 %v576
    %v894 = vunpack.c.l.b16 %v577
    %v895 = vunpack.c.h.b16 %v577
    %v896 = vunpack.c.l.b16 %v578
    %v897 = vunpack.c.h.b16 %v578
    %v898 = vunpack.c.l.b16 %v579
    %v899 = vunpack.c.h.b16 %v579
    %v900 = vunpack.c.l.b16 %v580
    %v901 = vunpack.c.h.b16 %v580
    %v902 = vunpack.c.l.b16 %v581
    %v903 = vunpack.c.h.b16 %v581
    %v904 = vpack.c.b16 %v708, %v704
    %v905 = vpack.c.b16 %v709, %v705
    %v906 = vpack.c.b16 %v710, %v706
    %v907 = vpack.c.b16 %v711, %v707
    %v908 = vpack.c.b16 %v716, %v712
    %v909 = vpack.c.b16 %v717, %v713
    %v910 = vpack.c.b16 %v718, %v714
    %v911 = vpack.c.b16 %v719, %v715
    %v912 = vpack.c.b16 %v724, %v720
    %v913 = vpack.c.b16 %v725, %v721
    %v914 = vpack.c.b16 %v726, %v722
    %v915 = vpack.c.b16 %v727, %v723
    %v916 = vpack.c.b16 %v732, %v728
    %v917 = vpack.c.b16 %v733, %v729
    %v918 = vpack.c.b16 %v734, %v730
    %v919 = vpack.c.b16 %v735, %v731
    %v920 = vpack.c.b16 %v740, %v736
    %v921 = vpack.c.b16 %v741, %v737
    %v922 = vpack.c.b16 %v742, %v738
    %v923 = vpack.c.b16 %v743, %v739
    %v924 = vpack.c.b16 %v748, %v744
    %v925 = vpack.c.b16 %v749, %v745
    %v926 = vpack.c.b16 %v750, %v746
    %v927 = vpack.c.b16 %v751, %v747
    %v928 = vpack.c.b16 %v756, %v752
    %v929 = vpack.c.b16 %v757, %v753
    %v930 = vpack.c.b16 %v758, %v754
    %v931 = vpack.c.b16 %v759, %v755
    %v932 = vpack.c.b16 %v764, %v760
    %v933 = vpack.c.b16 %v765, %v761
    %v934 = vpack.c.b16 %v766, %v762
    %v935 = vpack.c.b16 %v767, %v763
    %v936 = vpack.c.b16 %v772, %v768
    %v937 = vpack.c.b16 %v773, %v769
    %v938 = vpack.c.b16 %v774, %v770
    %v939 = vpack.c.b16 %v775, %v771
    %v940 = vpack.c.b16 %v780, %v776
    %v941 = vpack.c.b16 %v781, %v777
    %v942 = vpack.c.b16 %v782, %v778
    %v943 = vpack.c.b16 %v783, %v779
    %v944 = vpack.c.b16 %v788, %v784
    %v945 = vpack.c.b16 %v789, %v785
    %v946 = vpack.c.b16 %v790, %v786
    %v947 = vpack.c.b16 %v791, %v787
    %v948 = vpack.c.b16 %v796, %v792
    %v949 = vpack.c.b16 %v797, %v793
    %v950 = vpack.c.b16 %v798, %v794
    %v951 = vpack.c.b16 %v799, %v795
    %v952 = vpack.c.b16 %v804, %v800
    %v953 = vpack.c.b16 %v805, %v801
    %v954 = vpack.c.b16 %v806, %v802
    %v955 = vpack.c.b16 %v807, %v803
    %v956 = vpack.c.b16 %v812, %v808
    %v957 = vpack.c.b16 %v813, %v809
    %v958 = vpack.c.b16 %v814, %v810
    %v959 = vpack.c.b16 %v815, %v811
    %v960 = vpack.c.b16 %v820, %v816
    %v961 = vpack.c.b16 %v821, %v817
    %v962 = vpack.c.b16 %v822, %v818
    %v963 = vpack.c.b16 %v823, %v819
    %v964 = vpack.c.b16 %v828, %v824
    %v965 = vpack.c.b16 %v829, %v825
    %v966 = vpack.c.b16 %v830, %v826
    %v967 = vpack.c.b16 %v831, %v827
    %v968 = vpack.c.b16 %v836, %v832
    %v969 = vpack.c.b16 %v837, %v833
    %v970 = vpack.c.b16 %v838, %v834
    %v971 = vpack.c.b16 %v839, %v835
    %v972 = vpack.c.b16 %v844, %v840
    %v973 = vpack.c.b16 %v845, %v841
    %v974 = vpack.c.b16 %v846, %v842
    %v975 = vpack.c.b16 %v847, %v843
    %v976 = vpack.c.b16 %v852, %v848
    %v977 = vpack.c.b16 %v853, %v849
    %v978 = vpack.c.b16 %v854, %v850
    %v979 = vpack.c.b16 %v855, %v851
    %v980 = vpack.c.b16 %v860, %v856
    %v981 = vpack.c.b16 %v861, %v857
    %v982 = vpack.c.b16 %v862, %v858
    %v983 = vpack.c.b16 %v863, %v859
    %v984 = vpack.c.b16 %v868, %v864
    %v985 = vpack.c.b16 %v869, %v865
    %v986 = vpack.c.b16 %v870, %v866
    %v987 = vpack.c.b16 %v871, %v867
    %v988 = vpack.c.b16 %v876, %v872
    %v989 = vpack.c.b16 %v877, %v873
    %v990 = vpack.c.b16 %v878, %v874
    %v991 = vpack.c.b16 %v879, %v875
    %v992 = vpack.c.b16 %v884, %v880
    %v993 = vpack.c.b16 %v885, %v881
    %v994 = vpack.c.b16 %v886, %v882
    %v995 = vpack.c.b16 %v887, %v883
    %v996 = vpack.c.b16 %v892, %v888
    %v997 = vpack.c.b16 %v893, %v889
    %v998 = vpack.c.b16 %v894, %v890
    %v999 = vpack.c.b16 %v895, %v891
    %v1000 = vpack.c.b16 %v900, %v896
    %v1001 = vpack.c.b16 %v901, %v897
    %v1002 = vpack.c.b16 %v902, %v898
    %v1003 = vpack.c.b16 %v903, %v899
    %vm1104 = vcmask 130048
    %v1106 = vsel %vm1104, %v481, 0
    %1108 = vmatprep.subr.bf16.mxu0 %v933
    %1109 = vmatpush1.bf16.msra.mxu0 %v932
    %1110 = vmatprep.subr.bf16.mxu0 %v929
    %1111 = vmatpush1.bf16.msra.mxu0 %v928
    %1112 = vmatprep.subr.bf16.mxu0 %v925
    %1113 = vmatpush1.bf16.msra.mxu0 %v924
    %1114 = vmatprep.subr.bf16.mxu0 %v921
    %1115 = vmatpush1.bf16.msra.mxu0 %v920
    %1116 = vmatprep.subr.bf16.mxu0 %v917
    %1117 = vmatpush1.bf16.msra.mxu0 %v916
    %1118 = vmatprep.subr.bf16.mxu0 %v913
    %1119 = vmatpush1.bf16.msra.mxu0 %v912
    %1120 = vmatprep.subr.bf16.mxu0 %v909
    %1121 = vmatpush1.bf16.msra.mxu0 %v908
    %1122 = vmatprep.subr.bf16.mxu0 %v905
    %1123 = vmatpush1.bf16.msra.mxu0 %v904
    %1124 = vmatprep.subr.bf16.mxu0 %v965
    %1125 = vmatpush2.bf16.msra.mxu0 %v964
    %1126 = vmatprep.subr.bf16.mxu0 %v961
    %1127 = vmatpush2.bf16.msra.mxu0 %v960
    %1128 = vmatprep.subr.bf16.mxu0 %v957
    %1129 = vmatpush2.bf16.msra.mxu0 %v956
    %1130 = vmatprep.subr.bf16.mxu0 %v953
    %1131 = vmatpush2.bf16.msra.mxu0 %v952
    %1132 = vmatprep.subr.bf16.mxu0 %v949
    %1133 = vmatpush2.bf16.msra.mxu0 %v948
    %1134 = vmatprep.subr.bf16.mxu0 %v945
    %1135 = vmatpush2.bf16.msra.mxu0 %v944
    %1136 = vmatprep.subr.bf16.mxu0 %v941
    %1137 = vmatpush2.bf16.msra.mxu0 %v940
    %1138 = vmatprep.subr.bf16.mxu0 %v937
    %1139 = vmatpush2.bf16.msra.mxu0 %v936
    %1140 = vmatprep.mubr.bf16.mxu0 %v479
    %1141 = vmatmul.mubr.bf16.gmra.mxu0 %v478
    %v1142 = vpop.f32.mrf.mxu0
    %v1143 = vadd.f32 %v587, %v1142
    %v1144 = vpop.f32.mrf.mxu0
    %v1145 = vadd.f32 %v591, %v1144
    %v1146 = vpop.f32.mrf.mxu0
    %v1147 = vpop.f32.mrf.mxu0
    %1148 = vdwg.mxu0
    %1149 = vmatprep.subr.bf16.mxu0 %v997
    %1150 = vmatpush1.bf16.msra.mxu0 %v996
    %1151 = vmatprep.subr.bf16.mxu0 %v993
    %1152 = vmatpush1.bf16.msra.mxu0 %v992
    %1153 = vmatprep.subr.bf16.mxu0 %v989
    %1154 = vmatpush1.bf16.msra.mxu0 %v988
    %1155 = vmatprep.subr.bf16.mxu0 %v985
    %1156 = vmatpush1.bf16.msra.mxu0 %v984
    %1157 = vmatprep.subr.bf16.mxu0 %v981
    %1158 = vmatpush1.bf16.msra.mxu0 %v980
    %1159 = vmatprep.subr.bf16.mxu0 %v977
    %1160 = vmatpush1.bf16.msra.mxu0 %v976
    %1161 = vmatprep.subr.bf16.mxu0 %v973
    %1162 = vmatpush1.bf16.msra.mxu0 %v972
    %1163 = vmatprep.subr.bf16.mxu0 %v969
    %1164 = vmatpush1.bf16.msra.mxu0 %v968
    %1165 = vmatprep.subr.bf16.mxu0 0
    %1166 = vmatpush2.bf16.msra.mxu0 0
    %1167 = vmatprep.subr.bf16.mxu0 0
    %1168 = vmatpush2.bf16.msra.mxu0 0
    %1169 = vmatprep.subr.bf16.mxu0 0
    %1170 = vmatpush2.bf16.msra.mxu0 0
    %1171 = vmatprep.subr.bf16.mxu0 0
    %1172 = vmatpush2.bf16.msra.mxu0 0
    %1173 = vmatprep.subr.bf16.mxu0 0
    %1174 = vmatpush2.bf16.msra.mxu0 0
    %1175 = vmatprep.subr.bf16.mxu0 0
    %1176 = vmatpush2.bf16.msra.mxu0 0
    %1177 = vmatprep.subr.bf16.mxu0 0
    %1178 = vmatpush2.bf16.msra.mxu0 0
    %1179 = vmatprep.subr.bf16.mxu0 %v1001
    %1180 = vmatpush2.bf16.msra.mxu0 %v1000
    %1181 = vmatprep.mubr.bf16.mxu0 %v1106
    %1182 = vmatmul.mubr.bf16.gmra.mxu0 %v480
    %v1183 = vpop.f32.mrf.mxu0
    %v1184 = vadd.f32 %v1143, %v1183
    %v1185 = vpop.f32.mrf.mxu0
    %v1186 = vadd.f32 %v1145, %v1185
    %v1187 = vpop.f32.mrf.mxu0
    %v1188 = vpop.f32.mrf.mxu0
    %1189 = vdwg.mxu0
    %1190 = vmatprep.subr.bf16.mxu0 %v935
    %1191 = vmatpush1.bf16.msra.mxu0 %v934
    %1192 = vmatprep.subr.bf16.mxu0 %v931
    %1193 = vmatpush1.bf16.msra.mxu0 %v930
    %1194 = vmatprep.subr.bf16.mxu0 %v927
    %1195 = vmatpush1.bf16.msra.mxu0 %v926
    %1196 = vmatprep.subr.bf16.mxu0 %v923
    %1197 = vmatpush1.bf16.msra.mxu0 %v922
    %1198 = vmatprep.subr.bf16.mxu0 %v919
    %1199 = vmatpush1.bf16.msra.mxu0 %v918
    %1200 = vmatprep.subr.bf16.mxu0 %v915
    %1201 = vmatpush1.bf16.msra.mxu0 %v914
    %1202 = vmatprep.subr.bf16.mxu0 %v911
    %1203 = vmatpush1.bf16.msra.mxu0 %v910
    %1204 = vmatprep.subr.bf16.mxu0 %v907
    %1205 = vmatpush1.bf16.msra.mxu0 %v906
    %1206 = vmatprep.subr.bf16.mxu0 %v967
    %1207 = vmatpush2.bf16.msra.mxu0 %v966
    %1208 = vmatprep.subr.bf16.mxu0 %v963
    %1209 = vmatpush2.bf16.msra.mxu0 %v962
    %1210 = vmatprep.subr.bf16.mxu0 %v959
    %1211 = vmatpush2.bf16.msra.mxu0 %v958
    %1212 = vmatprep.subr.bf16.mxu0 %v955
    %1213 = vmatpush2.bf16.msra.mxu0 %v954
    %1214 = vmatprep.subr.bf16.mxu0 %v951
    %1215 = vmatpush2.bf16.msra.mxu0 %v950
    %1216 = vmatprep.subr.bf16.mxu0 %v947
    %1217 = vmatpush2.bf16.msra.mxu0 %v946
    %1218 = vmatprep.subr.bf16.mxu0 %v943
    %1219 = vmatpush2.bf16.msra.mxu0 %v942
    %1220 = vmatprep.subr.bf16.mxu0 %v939
    %1221 = vmatpush2.bf16.msra.mxu0 %v938
    %1222 = vmatprep.mubr.bf16.mxu0 %v479
    %1223 = vmatmul.mubr.bf16.gmra.mxu0 %v478
    %v1224 = vpop.f32.mrf.mxu0
    %v1225 = vadd.f32 %v595, %v1224
    %v1226 = vpop.f32.mrf.mxu0
    %v1227 = vadd.f32 %v599, %v1226
    %v1228 = vpop.f32.mrf.mxu0
    %v1229 = vpop.f32.mrf.mxu0
    %1230 = vdwg.mxu0
    %1231 = vmatprep.subr.bf16.mxu0 %v999
    %1232 = vmatpush1.bf16.msra.mxu0 %v998
    %1233 = vmatprep.subr.bf16.mxu0 %v995
    %1234 = vmatpush1.bf16.msra.mxu0 %v994
    %1235 = vmatprep.subr.bf16.mxu0 %v991
    %1236 = vmatpush1.bf16.msra.mxu0 %v990
    %1237 = vmatprep.subr.bf16.mxu0 %v987
    %1238 = vmatpush1.bf16.msra.mxu0 %v986
    %1239 = vmatprep.subr.bf16.mxu0 %v983
    %1240 = vmatpush1.bf16.msra.mxu0 %v982
    %1241 = vmatprep.subr.bf16.mxu0 %v979
    %1242 = vmatpush1.bf16.msra.mxu0 %v978
    %1243 = vmatprep.subr.bf16.mxu0 %v975
    %1244 = vmatpush1.bf16.msra.mxu0 %v974
    %1245 = vmatprep.subr.bf16.mxu0 %v971
    %1246 = vmatpush1.bf16.msra.mxu0 %v970
    %1247 = vmatprep.subr.bf16.mxu0 0
    %1248 = vmatpush2.bf16.msra.mxu0 0
    %1249 = vmatprep.subr.bf16.mxu0 0
    %1250 = vmatpush2.bf16.msra.mxu0 0
    %1251 = vmatprep.subr.bf16.mxu0 0
    %1252 = vmatpush2.bf16.msra.mxu0 0
    %1253 = vmatprep.subr.bf16.mxu0 0
    %1254 = vmatpush2.bf16.msra.mxu0 0
    %1255 = vmatprep.subr.bf16.mxu0 0
    %1256 = vmatpush2.bf16.msra.mxu0 0
    %1257 = vmatprep.subr.bf16.mxu0 0
    %1258 = vmatpush2.bf16.msra.mxu0 0
    %1259 = vmatprep.subr.bf16.mxu0 0
    %1260 = vmatpush2.bf16.msra.mxu0 0
    %1261 = vmatprep.subr.bf16.mxu0 %v1003
    %1262 = vmatpush2.bf16.msra.mxu0 %v1002
    %1263 = vmatprep.mubr.bf16.mxu0 %v1106
    %1264 = vmatmul.mubr.bf16.gmra.mxu0 %v480
    %v1265 = vpop.f32.mrf.mxu0
    %v1266 = vadd.f32 %v1225, %v1265
    %v1267 = vpop.f32.mrf.mxu0
    %v1268 = vadd.f32 %v1227, %v1267
    %v1269 = vpop.f32.mrf.mxu0
    %v1270 = vpop.f32.mrf.mxu0
    %1271 = vdwg.mxu0
    %vm1272 = vcmp.gt.f32.partialorder %v1184, 0.0
    %vm1273 = vcmp.gt.f32.partialorder %v1186, 0.0
    %vm1274 = vcmp.gt.f32.partialorder %v1266, 0.0
    %vm1275 = vcmp.gt.f32.partialorder %v1268, 0.0
    %v1276 = vmul.f32 %v1184, 0.2
    %v1277 = vmul.f32 %v1186, 0.2
    %v1278 = vmul.f32 %v1266, 0.2
    %v1279 = vmul.f32 %v1268, 0.2
    %v1280 = vsel %vm1272, %v1184, %v1276
    %v1281 = vsel %vm1273, %v1186, %v1277
    %v1282 = vsel %vm1274, %v1266, %v1278
    %v1283 = vsel %vm1275, %v1268, %v1279
    %v1284 = vpack.c.bf16 %v1280, %v1280
    %v1285 = vpack.c.bf16 %v1281, %v1281
    %v1286 = vpack.c.bf16 %v1282, %v1282
    %v1287 = vpack.c.bf16 %v1283, %v1283
    %v1288 = vld [vmem:[#allocation2] sm:$0xff]
    %v1289 = vld [vmem:[#allocation2 + $0x8] sm:$0xff]
    %v1290 = vld [vmem:[#allocation2 + $0x10] sm:$0xff]
    %v1291 = vld [vmem:[#allocation2 + $0x18] sm:$0xf]
    %v1292 = vld [vmem:[#allocation2 + $0x1c] sm:$0xff]
    %v1293 = vld [vmem:[#allocation2 + $0x24] sm:$0xff]
    %v1294 = vld [vmem:[#allocation2 + $0x2c] sm:$0xff]
    %v1295 = vld [vmem:[#allocation2 + $0x34] sm:$0xf]
    %v1296 = vld [vmem:[#allocation2 + $0x38] sm:$0xff]
    %v1297 = vld [vmem:[#allocation2 + $0x40] sm:$0xff]
    %v1298 = vld [vmem:[#allocation2 + $0x48] sm:$0xff]
    %v1299 = vld [vmem:[#allocation2 + $0x50] sm:$0xf]
    %v1300 = vld [vmem:[#allocation2 + $0x54] sm:$0xff]
    %v1301 = vld [vmem:[#allocation2 + $0x5c] sm:$0xff]
    %v1302 = vld [vmem:[#allocation2 + $0x64] sm:$0xff]
    %v1303 = vld [vmem:[#allocation2 + $0x6c] sm:$0xf]
    %v1304 = vld [vmem:[#allocation2 + $0x70] sm:$0xff]
    %v1305 = vld [vmem:[#allocation2 + $0x78] sm:$0xff]
    %v1306 = vld [vmem:[#allocation2 + $0x80] sm:$0xff]
    %v1307 = vld [vmem:[#allocation2 + $0x88] sm:$0xf]
    %v1308 = vld [vmem:[#allocation2 + $0x8c] sm:$0xff]
    %v1309 = vld [vmem:[#allocation2 + $0x94] sm:$0xff]
    %v1310 = vld [vmem:[#allocation2 + $0x9c] sm:$0xff]
    %v1311 = vld [vmem:[#allocation2 + $0xa4] sm:$0xf]
    %v1312 = vld [vmem:[#allocation2 + $0xa8] sm:$0xff]
    %v1313 = vld [vmem:[#allocation2 + $0xb0] sm:$0xff]
    %v1314 = vld [vmem:[#allocation2 + $0xb8] sm:$0xff]
    %v1315 = vld [vmem:[#allocation2 + $0xc0] sm:$0xf]
    %v1316 = vld [vmem:[#allocation2 + $0xc4] sm:$0xff]
    %v1317 = vld [vmem:[#allocation2 + $0xcc] sm:$0xff]
    %v1318 = vld [vmem:[#allocation2 + $0xd4] sm:$0xff]
    %v1319 = vld [vmem:[#allocation2 + $0xdc] sm:$0xf]
    %v1320 = vld [vmem:[#allocation2 + $0xe0] sm:$0xff]
    %v1321 = vld [vmem:[#allocation2 + $0xe8] sm:$0xff]
    %v1322 = vld [vmem:[#allocation2 + $0xf0] sm:$0xff]
    %v1323 = vld [vmem:[#allocation2 + $0xf8] sm:$0xf]
    %v1324 = vld [vmem:[#allocation2 + $0xfc] sm:$0xff]
    %v1325 = vld [vmem:[#allocation2 + $0x104] sm:$0xff]
    %v1326 = vld [vmem:[#allocation2 + $0x10c] sm:$0xff]
    %v1327 = vld [vmem:[#allocation2 + $0x114] sm:$0xf]
    %v1328 = vld [vmem:[#allocation2 + $0x118] sm:$0xff]
    %v1329 = vld [vmem:[#allocation2 + $0x120] sm:$0xff]
    %v1330 = vld [vmem:[#allocation2 + $0x128] sm:$0xff]
    %v1331 = vld [vmem:[#allocation2 + $0x130] sm:$0xf]
    %v1332 = vld [vmem:[#allocation2 + $0x134] sm:$0xff]
    %v1333 = vld [vmem:[#allocation2 + $0x13c] sm:$0xff]
    %v1334 = vld [vmem:[#allocation2 + $0x144] sm:$0xff]
    %v1335 = vld [vmem:[#allocation2 + $0x14c] sm:$0xf]
    %v1336 = vld [vmem:[#allocation2 + $0x150] sm:$0xff]
    %v1337 = vld [vmem:[#allocation2 + $0x158] sm:$0xff]
    %v1338 = vld [vmem:[#allocation2 + $0x160] sm:$0xff]
    %v1339 = vld [vmem:[#allocation2 + $0x168] sm:$0xf]
    %v1340 = vld [vmem:[#allocation2 + $0x16c] sm:$0xff]
    %v1341 = vld [vmem:[#allocation2 + $0x174] sm:$0xff]
    %v1342 = vld [vmem:[#allocation2 + $0x17c] sm:$0xff]
    %v1343 = vld [vmem:[#allocation2 + $0x184] sm:$0xf]
    %v1344 = vld [vmem:[#allocation2 + $0x188] sm:$0xff]
    %v1345 = vld [vmem:[#allocation2 + $0x190] sm:$0xff]
    %v1346 = vld [vmem:[#allocation2 + $0x198] sm:$0xff]
    %v1347 = vld [vmem:[#allocation2 + $0x1a0] sm:$0xf]
    %v1348 = vld [vmem:[#allocation2 + $0x1a4] sm:$0xff]
    %v1349 = vld [vmem:[#allocation2 + $0x1ac] sm:$0xff]
    %v1350 = vld [vmem:[#allocation2 + $0x1b4] sm:$0xff]
    %v1351 = vld [vmem:[#allocation2 + $0x1bc] sm:$0xf]
    %v1352 = vld [vmem:[#allocation2 + $0x1c0] sm:$0xff]
    %v1353 = vld [vmem:[#allocation2 + $0x1c8] sm:$0xff]
    %v1354 = vld [vmem:[#allocation2 + $0x1d0] sm:$0xff]
    %v1355 = vld [vmem:[#allocation2 + $0x1d8] sm:$0xf]
    %v1356 = vld [vmem:[#allocation2 + $0x1dc] sm:$0xff]
    %v1357 = vld [vmem:[#allocation2 + $0x1e4] sm:$0xff]
    %v1358 = vld [vmem:[#allocation2 + $0x1ec] sm:$0xff]
    %v1359 = vld [vmem:[#allocation2 + $0x1f4] sm:$0xf]
    %v1360 = vld [vmem:[#allocation2 + $0x1f8] sm:$0xff]
    %v1361 = vld [vmem:[#allocation2 + $0x200] sm:$0xff]
    %v1362 = vld [vmem:[#allocation2 + $0x208] sm:$0xff]
    %v1363 = vld [vmem:[#allocation2 + $0x210] sm:$0xf]
    %v1364 = vld [vmem:[#allocation2 + $0x214] sm:$0xff]
    %v1365 = vld [vmem:[#allocation2 + $0x21c] sm:$0xff]
    %v1366 = vld [vmem:[#allocation2 + $0x224] sm:$0xff]
    %v1367 = vld [vmem:[#allocation2 + $0x22c] sm:$0xf]
    %v1368 = vld [vmem:[#allocation2 + $0x230] sm:$0xff]
    %v1369 = vld [vmem:[#allocation2 + $0x238] sm:$0xff]
    %v1370 = vld [vmem:[#allocation2 + $0x240] sm:$0xff]
    %v1371 = vld [vmem:[#allocation2 + $0x248] sm:$0xf]
    %v1372 = vld [vmem:[#allocation2 + $0x24c] sm:$0xff]
    %v1373 = vld [vmem:[#allocation2 + $0x254] sm:$0xff]
    %v1374 = vld [vmem:[#allocation2 + $0x25c] sm:$0xff]
    %v1375 = vld [vmem:[#allocation2 + $0x264] sm:$0xf]
    %v1376 = vld [vmem:[#allocation2 + $0x268] sm:$0xff]
    %v1377 = vld [vmem:[#allocation2 + $0x270] sm:$0xff]
    %v1378 = vld [vmem:[#allocation2 + $0x278] sm:$0xff]
    %v1379 = vld [vmem:[#allocation2 + $0x280] sm:$0xf]
    %v1380 = vld [vmem:[#allocation2 + $0x284] sm:$0xff]
    %v1381 = vld [vmem:[#allocation2 + $0x28c] sm:$0xff]
    %v1382 = vld [vmem:[#allocation2 + $0x294] sm:$0xff]
    %v1383 = vld [vmem:[#allocation2 + $0x29c] sm:$0xf]
    %v1384 = vld [vmem:[#allocation2 + $0x2a0] sm:$0xff]
    %v1385 = vld [vmem:[#allocation2 + $0x2a8] sm:$0xff]
    %v1386 = vld [vmem:[#allocation2 + $0x2b0] sm:$0xff]
    %v1387 = vld [vmem:[#allocation2 + $0x2b8] sm:$0xf]
    %v1388 = vld [vmem:[#allocation2 + $0x2bc] sm:$0xff]
    %v1389 = vld [vmem:[#allocation2 + $0x2c4] sm:$0xff]
    %v1390 = vld [vmem:[#allocation2 + $0x2cc] sm:$0xff]
    %v1391 = vld [vmem:[#allocation2 + $0x2d4] sm:$0xf]
    %v1392 = vld [vmem:[#allocation2 + $0x2d8] sm:$0xff]
    %v1393 = vld [vmem:[#allocation2 + $0x2e0] sm:$0xff]
    %v1394 = vld [vmem:[#allocation2 + $0x2e8] sm:$0xff]
    %v1395 = vld [vmem:[#allocation2 + $0x2f0] sm:$0xf]
    %v1396 = vld [vmem:[#allocation2 + $0x2f4] sm:$0xff]
    %v1397 = vld [vmem:[#allocation2 + $0x2fc] sm:$0xff]
    %v1398 = vld [vmem:[#allocation2 + $0x304] sm:$0xff]
    %v1399 = vld [vmem:[#allocation2 + $0x30c] sm:$0xf]
    %v1400 = vld [vmem:[#allocation2 + $0x310] sm:$0xff]
    %v1401 = vld [vmem:[#allocation2 + $0x318] sm:$0xff]
    %v1402 = vld [vmem:[#allocation2 + $0x320] sm:$0xff]
    %v1403 = vld [vmem:[#allocation2 + $0x328] sm:$0xf]
    %v1404 = vld [vmem:[#allocation2 + $0x32c] sm:$0xff]
    %v1405 = vld [vmem:[#allocation2 + $0x334] sm:$0xff]
    %v1406 = vld [vmem:[#allocation2 + $0x33c] sm:$0xff]
    %v1407 = vld [vmem:[#allocation2 + $0x344] sm:$0xf]
    %v1408 = vld [vmem:[#allocation2 + $0x348] sm:$0xff]
    %v1409 = vld [vmem:[#allocation2 + $0x350] sm:$0xff]
    %v1410 = vld [vmem:[#allocation2 + $0x358] sm:$0xff]
    %v1411 = vld [vmem:[#allocation2 + $0x360] sm:$0xf]
    %v1412 = vld [vmem:[#allocation2 + $0x364] sm:$0xff]
    %v1413 = vld [vmem:[#allocation2 + $0x36c] sm:$0xff]
    %v1414 = vld [vmem:[#allocation2 + $0x374] sm:$0xff]
    %v1415 = vld [vmem:[#allocation2 + $0x37c] sm:$0xf]
    %v1416 = vld [vmem:[#allocation2 + $0x380] sm:$0xff]
    %v1417 = vld [vmem:[#allocation2 + $0x388] sm:$0xff]
    %v1418 = vld [vmem:[#allocation2 + $0x390] sm:$0xff]
    %v1419 = vld [vmem:[#allocation2 + $0x398] sm:$0xf]
    %v1420 = vld [vmem:[#allocation2 + $0x39c] sm:$0xff]
    %v1421 = vld [vmem:[#allocation2 + $0x3a4] sm:$0xff]
    %v1422 = vld [vmem:[#allocation2 + $0x3ac] sm:$0xff]
    %v1423 = vld [vmem:[#allocation2 + $0x3b4] sm:$0xf]
    %v1424 = vld [vmem:[#allocation2 + $0x3b8] sm:$0xff]
    %v1425 = vld [vmem:[#allocation2 + $0x3c0] sm:$0xff]
    %v1426 = vld [vmem:[#allocation2 + $0x3c8] sm:$0xff]
    %v1427 = vld [vmem:[#allocation2 + $0x3d0] sm:$0xf]
    %v1428 = vld [vmem:[#allocation2 + $0x3d4] sm:$0xff]
    %v1429 = vld [vmem:[#allocation2 + $0x3dc] sm:$0xff]
    %v1430 = vld [vmem:[#allocation2 + $0x3e4] sm:$0xff]
    %v1431 = vld [vmem:[#allocation2 + $0x3ec] sm:$0xf]
    %v1432 = vld [vmem:[#allocation2 + $0x3f0] sm:$0xff]
    %v1433 = vld [vmem:[#allocation2 + $0x3f8] sm:$0xff]
    %v1434 = vld [vmem:[#allocation2 + $0x400] sm:$0xff]
    %v1435 = vld [vmem:[#allocation2 + $0x408] sm:$0xf]
    %v1436 = vld [vmem:[#allocation2 + $0x40c] sm:$0xff]
    %v1437 = vld [vmem:[#allocation2 + $0x414] sm:$0xff]
    %v1438 = vld [vmem:[#allocation2 + $0x41c] sm:$0xff]
    %v1439 = vld [vmem:[#allocation2 + $0x424] sm:$0xf]
    %v1440 = vld [vmem:[#allocation2 + $0x428] sm:$0xff]
    %v1441 = vld [vmem:[#allocation2 + $0x430] sm:$0xff]
    %v1442 = vld [vmem:[#allocation2 + $0x438] sm:$0xff]
    %v1443 = vld [vmem:[#allocation2 + $0x440] sm:$0xf]
    %v1444 = vld [vmem:[#allocation2 + $0x444] sm:$0xff]
    %v1445 = vld [vmem:[#allocation2 + $0x44c] sm:$0xff]
    %v1446 = vld [vmem:[#allocation2 + $0x454] sm:$0xff]
    %v1447 = vld [vmem:[#allocation2 + $0x45c] sm:$0xf]
    %v1448 = vld [vmem:[#allocation2 + $0x460] sm:$0xff]
    %v1449 = vld [vmem:[#allocation2 + $0x468] sm:$0xff]
    %v1450 = vld [vmem:[#allocation2 + $0x470] sm:$0xff]
    %v1451 = vld [vmem:[#allocation2 + $0x478] sm:$0xf]
    %v1452 = vld [vmem:[#allocation2 + $0x47c] sm:$0xff]
    %v1453 = vld [vmem:[#allocation2 + $0x484] sm:$0xff]
    %v1454 = vld [vmem:[#allocation2 + $0x48c] sm:$0xff]
    %v1455 = vld [vmem:[#allocation2 + $0x494] sm:$0xf]
    %v1456 = vld [vmem:[#allocation2 + $0x498] sm:$0xff]
    %v1457 = vld [vmem:[#allocation2 + $0x4a0] sm:$0xff]
    %v1458 = vld [vmem:[#allocation2 + $0x4a8] sm:$0xff]
    %v1459 = vld [vmem:[#allocation2 + $0x4b0] sm:$0xf]
    %v1460 = vld [vmem:[#allocation2 + $0x4b4] sm:$0xff]
    %v1461 = vld [vmem:[#allocation2 + $0x4bc] sm:$0xff]
    %v1462 = vld [vmem:[#allocation2 + $0x4c4] sm:$0xff]
    %v1463 = vld [vmem:[#allocation2 + $0x4cc] sm:$0xf]
    %v1464 = vld [vmem:[#allocation2 + $0x4d0] sm:$0xff]
    %v1465 = vld [vmem:[#allocation2 + $0x4d8] sm:$0xff]
    %v1466 = vld [vmem:[#allocation2 + $0x4e0] sm:$0xff]
    %v1467 = vld [vmem:[#allocation2 + $0x4e8] sm:$0xf]
    %v1468 = vld [vmem:[#allocation2 + $0x4ec] sm:$0xff]
    %v1469 = vld [vmem:[#allocation2 + $0x4f4] sm:$0xff]
    %v1470 = vld [vmem:[#allocation2 + $0x4fc] sm:$0xff]
    %v1471 = vld [vmem:[#allocation2 + $0x504] sm:$0xf]
    %v1472 = vld [vmem:[#allocation2 + $0x508] sm:$0xff]
    %v1473 = vld [vmem:[#allocation2 + $0x510] sm:$0xff]
    %v1474 = vld [vmem:[#allocation2 + $0x518] sm:$0xff]
    %v1475 = vld [vmem:[#allocation2 + $0x520] sm:$0xf]
    %v1476 = vld [vmem:[#allocation2 + $0x524] sm:$0xff]
    %v1477 = vld [vmem:[#allocation2 + $0x52c] sm:$0xff]
    %v1478 = vld [vmem:[#allocation2 + $0x534] sm:$0xff]
    %v1479 = vld [vmem:[#allocation2 + $0x53c] sm:$0xf]
    %v1480 = vld [vmem:[#allocation2 + $0x540] sm:$0xff]
    %v1481 = vld [vmem:[#allocation2 + $0x548] sm:$0xff]
    %v1482 = vld [vmem:[#allocation2 + $0x550] sm:$0xff]
    %v1483 = vld [vmem:[#allocation2 + $0x558] sm:$0xf]
    %v1484 = vld [vmem:[#allocation2 + $0x55c] sm:$0xff]
    %v1485 = vld [vmem:[#allocation2 + $0x564] sm:$0xff]
    %v1486 = vld [vmem:[#allocation2 + $0x56c] sm:$0xff]
    %v1487 = vld [vmem:[#allocation2 + $0x574] sm:$0xf]
    %v1488 = vld [vmem:[%s6] sm:$0xff]
    %v1490 = vlaneseq
    %v1491 = vshrl.u32 %v1490, 7
    %v1492 = vsub.s32 0, %v1491
    %v1493 = vrot.slane %v1488, %v1492
    %v1494 = vlaneseq
    %v1495 = vshrl.u32 %v1494, 7
    %v1496 = vsub.s32 1, %v1495
    %v1497 = vrot.slane %v1488, %v1496
    %v1498 = vlaneseq
    %v1499 = vshrl.u32 %v1498, 7
    %v1500 = vsub.s32 2, %v1499
    %v1501 = vrot.slane %v1488, %v1500
    %v1502 = vlaneseq
    %v1503 = vshrl.u32 %v1502, 7
    %v1504 = vsub.s32 3, %v1503
    %v1505 = vrot.slane %v1488, %v1504
    %v1506 = vlaneseq
    %v1507 = vshrl.u32 %v1506, 7
    %v1508 = vsub.s32 4, %v1507
    %v1509 = vrot.slane %v1488, %v1508
    %v1510 = vlaneseq
    %v1511 = vshrl.u32 %v1510, 7
    %v1512 = vsub.s32 5, %v1511
    %v1513 = vrot.slane %v1488, %v1512
    %v1514 = vlaneseq
    %v1515 = vshrl.u32 %v1514, 7
    %v1516 = vsub.s32 6, %v1515
    %v1517 = vrot.slane %v1488, %v1516
    %v1725 = vunpack.c.l.b16 %v1288
    %v1726 = vunpack.c.h.b16 %v1288
    %v1727 = vunpack.c.l.b16 %v1289
    %v1728 = vunpack.c.h.b16 %v1289
    %v1729 = vunpack.c.l.b16 %v1290
    %v1730 = vunpack.c.h.b16 %v1290
    %v1731 = vunpack.c.l.b16 %v1291
    %v1732 = vunpack.c.l.b16 %v1292
    %v1733 = vunpack.c.h.b16 %v1292
    %v1734 = vunpack.c.l.b16 %v1293
    %v1735 = vunpack.c.h.b16 %v1293
    %v1736 = vunpack.c.l.b16 %v1294
    %v1737 = vunpack.c.h.b16 %v1294
    %v1738 = vunpack.c.l.b16 %v1295
    %v1739 = vunpack.c.l.b16 %v1296
    %v1740 = vunpack.c.h.b16 %v1296
    %v1741 = vunpack.c.l.b16 %v1297
    %v1742 = vunpack.c.h.b16 %v1297
    %v1743 = vunpack.c.l.b16 %v1298
    %v1744 = vunpack.c.h.b16 %v1298
    %v1745 = vunpack.c.l.b16 %v1299
    %v1746 = vunpack.c.l.b16 %v1300
    %v1747 = vunpack.c.h.b16 %v1300
    %v1748 = vunpack.c.l.b16 %v1301
    %v1749 = vunpack.c.h.b16 %v1301
    %v1750 = vunpack.c.l.b16 %v1302
    %v1751 = vunpack.c.h.b16 %v1302
    %v1752 = vunpack.c.l.b16 %v1303
    %v1753 = vunpack.c.l.b16 %v1304
    %v1754 = vunpack.c.h.b16 %v1304
    %v1755 = vunpack.c.l.b16 %v1305
    %v1756 = vunpack.c.h.b16 %v1305
    %v1757 = vunpack.c.l.b16 %v1306
    %v1758 = vunpack.c.h.b16 %v1306
    %v1759 = vunpack.c.l.b16 %v1307
    %v1760 = vunpack.c.l.b16 %v1308
    %v1761 = vunpack.c.h.b16 %v1308
    %v1762 = vunpack.c.l.b16 %v1309
    %v1763 = vunpack.c.h.b16 %v1309
    %v1764 = vunpack.c.l.b16 %v1310
    %v1765 = vunpack.c.h.b16 %v1310
    %v1766 = vunpack.c.l.b16 %v1311
    %v1767 = vunpack.c.l.b16 %v1312
    %v1768 = vunpack.c.h.b16 %v1312
    %v1769 = vunpack.c.l.b16 %v1313
    %v1770 = vunpack.c.h.b16 %v1313
    %v1771 = vunpack.c.l.b16 %v1314
    %v1772 = vunpack.c.h.b16 %v1314
    %v1773 = vunpack.c.l.b16 %v1315
    %v1774 = vunpack.c.l.b16 %v1316
    %v1775 = vunpack.c.h.b16 %v1316
    %v1776 = vunpack.c.l.b16 %v1317
    %v1777 = vunpack.c.h.b16 %v1317
    %v1778 = vunpack.c.l.b16 %v1318
    %v1779 = vunpack.c.h.b16 %v1318
    %v1780 = vunpack.c.l.b16 %v1319
    %v1781 = vunpack.c.l.b16 %v1320
    %v1782 = vunpack.c.h.b16 %v1320
    %v1783 = vunpack.c.l.b16 %v1321
    %v1784 = vunpack.c.h.b16 %v1321
    %v1785 = vunpack.c.l.b16 %v1322
    %v1786 = vunpack.c.h.b16 %v1322
    %v1787 = vunpack.c.l.b16 %v1323
    %v1788 = vunpack.c.l.b16 %v1324
    %v1789 = vunpack.c.h.b16 %v1324
    %v1790 = vunpack.c.l.b16 %v1325
    %v1791 = vunpack.c.h.b16 %v1325
    %v1792 = vunpack.c.l.b16 %v1326
    %v1793 = vunpack.c.h.b16 %v1326
    %v1794 = vunpack.c.l.b16 %v1327
    %v1795 = vunpack.c.l.b16 %v1328
    %v1796 = vunpack.c.h.b16 %v1328
    %v1797 = vunpack.c.l.b16 %v1329
    %v1798 = vunpack.c.h.b16 %v1329
    %v1799 = vunpack.c.l.b16 %v1330
    %v1800 = vunpack.c.h.b16 %v1330
    %v1801 = vunpack.c.l.b16 %v1331
    %v1802 = vunpack.c.l.b16 %v1332
    %v1803 = vunpack.c.h.b16 %v1332
    %v1804 = vunpack.c.l.b16 %v1333
    %v1805 = vunpack.c.h.b16 %v1333
    %v1806 = vunpack.c.l.b16 %v1334
    %v1807 = vunpack.c.h.b16 %v1334
    %v1808 = vunpack.c.l.b16 %v1335
    %v1809 = vunpack.c.l.b16 %v1336
    %v1810 = vunpack.c.h.b16 %v1336
    %v1811 = vunpack.c.l.b16 %v1337
    %v1812 = vunpack.c.h.b16 %v1337
    %v1813 = vunpack.c.l.b16 %v1338
    %v1814 = vunpack.c.h.b16 %v1338
    %v1815 = vunpack.c.l.b16 %v1339
    %v1816 = vunpack.c.l.b16 %v1340
    %v1817 = vunpack.c.h.b16 %v1340
    %v1818 = vunpack.c.l.b16 %v1341
    %v1819 = vunpack.c.h.b16 %v1341
    %v1820 = vunpack.c.l.b16 %v1342
    %v1821 = vunpack.c.h.b16 %v1342
    %v1822 = vunpack.c.l.b16 %v1343
    %v1823 = vunpack.c.l.b16 %v1344
    %v1824 = vunpack.c.h.b16 %v1344
    %v1825 = vunpack.c.l.b16 %v1345
    %v1826 = vunpack.c.h.b16 %v1345
    %v1827 = vunpack.c.l.b16 %v1346
    %v1828 = vunpack.c.h.b16 %v1346
    %v1829 = vunpack.c.l.b16 %v1347
    %v1830 = vunpack.c.l.b16 %v1348
    %v1831 = vunpack.c.h.b16 %v1348
    %v1832 = vunpack.c.l.b16 %v1349
    %v1833 = vunpack.c.h.b16 %v1349
    %v1834 = vunpack.c.l.b16 %v1350
    %v1835 = vunpack.c.h.b16 %v1350
    %v1836 = vunpack.c.l.b16 %v1351
    %v1837 = vunpack.c.l.b16 %v1352
    %v1838 = vunpack.c.h.b16 %v1352
    %v1839 = vunpack.c.l.b16 %v1353
    %v1840 = vunpack.c.h.b16 %v1353
    %v1841 = vunpack.c.l.b16 %v1354
    %v1842 = vunpack.c.h.b16 %v1354
    %v1843 = vunpack.c.l.b16 %v1355
    %v1844 = vunpack.c.l.b16 %v1356
    %v1845 = vunpack.c.h.b16 %v1356
    %v1846 = vunpack.c.l.b16 %v1357
    %v1847 = vunpack.c.h.b16 %v1357
    %v1848 = vunpack.c.l.b16 %v1358
    %v1849 = vunpack.c.h.b16 %v1358
    %v1850 = vunpack.c.l.b16 %v1359
    %v1851 = vunpack.c.l.b16 %v1360
    %v1852 = vunpack.c.h.b16 %v1360
    %v1853 = vunpack.c.l.b16 %v1361
    %v1854 = vunpack.c.h.b16 %v1361
    %v1855 = vunpack.c.l.b16 %v1362
    %v1856 = vunpack.c.h.b16 %v1362
    %v1857 = vunpack.c.l.b16 %v1363
    %v1858 = vunpack.c.l.b16 %v1364
    %v1859 = vunpack.c.h.b16 %v1364
    %v1860 = vunpack.c.l.b16 %v1365
    %v1861 = vunpack.c.h.b16 %v1365
    %v1862 = vunpack.c.l.b16 %v1366
    %v1863 = vunpack.c.h.b16 %v1366
    %v1864 = vunpack.c.l.b16 %v1367
    %v1865 = vunpack.c.l.b16 %v1368
    %v1866 = vunpack.c.h.b16 %v1368
    %v1867 = vunpack.c.l.b16 %v1369
    %v1868 = vunpack.c.h.b16 %v1369
    %v1869 = vunpack.c.l.b16 %v1370
    %v1870 = vunpack.c.h.b16 %v1370
    %v1871 = vunpack.c.l.b16 %v1371
    %v1872 = vunpack.c.l.b16 %v1372
    %v1873 = vunpack.c.h.b16 %v1372
    %v1874 = vunpack.c.l.b16 %v1373
    %v1875 = vunpack.c.h.b16 %v1373
    %v1876 = vunpack.c.l.b16 %v1374
    %v1877 = vunpack.c.h.b16 %v1374
    %v1878 = vunpack.c.l.b16 %v1375
    %v1879 = vunpack.c.l.b16 %v1376
    %v1880 = vunpack.c.h.b16 %v1376
    %v1881 = vunpack.c.l.b16 %v1377
    %v1882 = vunpack.c.h.b16 %v1377
    %v1883 = vunpack.c.l.b16 %v1378
    %v1884 = vunpack.c.h.b16 %v1378
    %v1885 = vunpack.c.l.b16 %v1379
    %v1886 = vunpack.c.l.b16 %v1380
    %v1887 = vunpack.c.h.b16 %v1380
    %v1888 = vunpack.c.l.b16 %v1381
    %v1889 = vunpack.c.h.b16 %v1381
    %v1890 = vunpack.c.l.b16 %v1382
    %v1891 = vunpack.c.h.b16 %v1382
    %v1892 = vunpack.c.l.b16 %v1383
    %v1893 = vunpack.c.l.b16 %v1384
    %v1894 = vunpack.c.h.b16 %v1384
    %v1895 = vunpack.c.l.b16 %v1385
    %v1896 = vunpack.c.h.b16 %v1385
    %v1897 = vunpack.c.l.b16 %v1386
    %v1898 = vunpack.c.h.b16 %v1386
    %v1899 = vunpack.c.l.b16 %v1387
    %v1900 = vunpack.c.l.b16 %v1388
    %v1901 = vunpack.c.h.b16 %v1388
    %v1902 = vunpack.c.l.b16 %v1389
    %v1903 = vunpack.c.h.b16 %v1389
    %v1904 = vunpack.c.l.b16 %v1390
    %v1905 = vunpack.c.h.b16 %v1390
    %v1906 = vunpack.c.l.b16 %v1391
    %v1907 = vunpack.c.l.b16 %v1392
    %v1908 = vunpack.c.h.b16 %v1392
    %v1909 = vunpack.c.l.b16 %v1393
    %v1910 = vunpack.c.h.b16 %v1393
    %v1911 = vunpack.c.l.b16 %v1394
    %v1912 = vunpack.c.h.b16 %v1394
    %v1913 = vunpack.c.l.b16 %v1395
    %v1914 = vunpack.c.l.b16 %v1396
    %v1915 = vunpack.c.h.b16 %v1396
    %v1916 = vunpack.c.l.b16 %v1397
    %v1917 = vunpack.c.h.b16 %v1397
    %v1918 = vunpack.c.l.b16 %v1398
    %v1919 = vunpack.c.h.b16 %v1398
    %v1920 = vunpack.c.l.b16 %v1399
    %v1921 = vunpack.c.l.b16 %v1400
    %v1922 = vunpack.c.h.b16 %v1400
    %v1923 = vunpack.c.l.b16 %v1401
    %v1924 = vunpack.c.h.b16 %v1401
    %v1925 = vunpack.c.l.b16 %v1402
    %v1926 = vunpack.c.h.b16 %v1402
    %v1927 = vunpack.c.l.b16 %v1403
    %v1928 = vunpack.c.l.b16 %v1404
    %v1929 = vunpack.c.h.b16 %v1404
    %v1930 = vunpack.c.l.b16 %v1405
    %v1931 = vunpack.c.h.b16 %v1405
    %v1932 = vunpack.c.l.b16 %v1406
    %v1933 = vunpack.c.h.b16 %v1406
    %v1934 = vunpack.c.l.b16 %v1407
    %v1935 = vunpack.c.l.b16 %v1408
    %v1936 = vunpack.c.h.b16 %v1408
    %v1937 = vunpack.c.l.b16 %v1409
    %v1938 = vunpack.c.h.b16 %v1409
    %v1939 = vunpack.c.l.b16 %v1410
    %v1940 = vunpack.c.h.b16 %v1410
    %v1941 = vunpack.c.l.b16 %v1411
    %v1942 = vunpack.c.l.b16 %v1412
    %v1943 = vunpack.c.h.b16 %v1412
    %v1944 = vunpack.c.l.b16 %v1413
    %v1945 = vunpack.c.h.b16 %v1413
    %v1946 = vunpack.c.l.b16 %v1414
    %v1947 = vunpack.c.h.b16 %v1414
    %v1948 = vunpack.c.l.b16 %v1415
    %v1949 = vunpack.c.l.b16 %v1416
    %v1950 = vunpack.c.h.b16 %v1416
    %v1951 = vunpack.c.l.b16 %v1417
    %v1952 = vunpack.c.h.b16 %v1417
    %v1953 = vunpack.c.l.b16 %v1418
    %v1954 = vunpack.c.h.b16 %v1418
    %v1955 = vunpack.c.l.b16 %v1419
    %v1956 = vunpack.c.l.b16 %v1420
    %v1957 = vunpack.c.h.b16 %v1420
    %v1958 = vunpack.c.l.b16 %v1421
    %v1959 = vunpack.c.h.b16 %v1421
    %v1960 = vunpack.c.l.b16 %v1422
    %v1961 = vunpack.c.h.b16 %v1422
    %v1962 = vunpack.c.l.b16 %v1423
    %v1963 = vunpack.c.l.b16 %v1424
    %v1964 = vunpack.c.h.b16 %v1424
    %v1965 = vunpack.c.l.b16 %v1425
    %v1966 = vunpack.c.h.b16 %v1425
    %v1967 = vunpack.c.l.b16 %v1426
    %v1968 = vunpack.c.h.b16 %v1426
    %v1969 = vunpack.c.l.b16 %v1427
    %v1970 = vunpack.c.l.b16 %v1428
    %v1971 = vunpack.c.h.b16 %v1428
    %v1972 = vunpack.c.l.b16 %v1429
    %v1973 = vunpack.c.h.b16 %v1429
    %v1974 = vunpack.c.l.b16 %v1430
    %v1975 = vunpack.c.h.b16 %v1430
    %v1976 = vunpack.c.l.b16 %v1431
    %v1977 = vunpack.c.l.b16 %v1432
    %v1978 = vunpack.c.h.b16 %v1432
    %v1979 = vunpack.c.l.b16 %v1433
    %v1980 = vunpack.c.h.b16 %v1433
    %v1981 = vunpack.c.l.b16 %v1434
    %v1982 = vunpack.c.h.b16 %v1434
    %v1983 = vunpack.c.l.b16 %v1435
    %v1984 = vunpack.c.l.b16 %v1436
    %v1985 = vunpack.c.h.b16 %v1436
    %v1986 = vunpack.c.l.b16 %v1437
    %v1987 = vunpack.c.h.b16 %v1437
    %v1988 = vunpack.c.l.b16 %v1438
    %v1989 = vunpack.c.h.b16 %v1438
    %v1990 = vunpack.c.l.b16 %v1439
    %v1991 = vunpack.c.l.b16 %v1440
    %v1992 = vunpack.c.h.b16 %v1440
    %v1993 = vunpack.c.l.b16 %v1441
    %v1994 = vunpack.c.h.b16 %v1441
    %v1995 = vunpack.c.l.b16 %v1442
    %v1996 = vunpack.c.h.b16 %v1442
    %v1997 = vunpack.c.l.b16 %v1443
    %v1998 = vunpack.c.l.b16 %v1444
    %v1999 = vunpack.c.h.b16 %v1444
    %v2000 = vunpack.c.l.b16 %v1445
    %v2001 = vunpack.c.h.b16 %v1445
    %v2002 = vunpack.c.l.b16 %v1446
    %v2003 = vunpack.c.h.b16 %v1446
    %v2004 = vunpack.c.l.b16 %v1447
    %v2005 = vunpack.c.l.b16 %v1448
    %v2006 = vunpack.c.h.b16 %v1448
    %v2007 = vunpack.c.l.b16 %v1449
    %v2008 = vunpack.c.h.b16 %v1449
    %v2009 = vunpack.c.l.b16 %v1450
    %v2010 = vunpack.c.h.b16 %v1450
    %v2011 = vunpack.c.l.b16 %v1451
    %v2012 = vunpack.c.l.b16 %v1452
    %v2013 = vunpack.c.h.b16 %v1452
    %v2014 = vunpack.c.l.b16 %v1453
    %v2015 = vunpack.c.h.b16 %v1453
    %v2016 = vunpack.c.l.b16 %v1454
    %v2017 = vunpack.c.h.b16 %v1454
    %v2018 = vunpack.c.l.b16 %v1455
    %v2019 = vunpack.c.l.b16 %v1456
    %v2020 = vunpack.c.h.b16 %v1456
    %v2021 = vunpack.c.l.b16 %v1457
    %v2022 = vunpack.c.h.b16 %v1457
    %v2023 = vunpack.c.l.b16 %v1458
    %v2024 = vunpack.c.h.b16 %v1458
    %v2025 = vunpack.c.l.b16 %v1459
    %v2026 = vunpack.c.l.b16 %v1460
    %v2027 = vunpack.c.h.b16 %v1460
    %v2028 = vunpack.c.l.b16 %v1461
    %v2029 = vunpack.c.h.b16 %v1461
    %v2030 = vunpack.c.l.b16 %v1462
    %v2031 = vunpack.c.h.b16 %v1462
    %v2032 = vunpack.c.l.b16 %v1463
    %v2033 = vunpack.c.l.b16 %v1464
    %v2034 = vunpack.c.h.b16 %v1464
    %v2035 = vunpack.c.l.b16 %v1465
    %v2036 = vunpack.c.h.b16 %v1465
    %v2037 = vunpack.c.l.b16 %v1466
    %v2038 = vunpack.c.h.b16 %v1466
    %v2039 = vunpack.c.l.b16 %v1467
    %v2040 = vunpack.c.l.b16 %v1468
    %v2041 = vunpack.c.h.b16 %v1468
    %v2042 = vunpack.c.l.b16 %v1469
    %v2043 = vunpack.c.h.b16 %v1469
    %v2044 = vunpack.c.l.b16 %v1470
    %v2045 = vunpack.c.h.b16 %v1470
    %v2046 = vunpack.c.l.b16 %v1471
    %v2047 = vunpack.c.l.b16 %v1472
    %v2048 = vunpack.c.h.b16 %v1472
    %v2049 = vunpack.c.l.b16 %v1473
    %v2050 = vunpack.c.h.b16 %v1473
    %v2051 = vunpack.c.l.b16 %v1474
    %v2052 = vunpack.c.h.b16 %v1474
    %v2053 = vunpack.c.l.b16 %v1475
    %v2054 = vunpack.c.l.b16 %v1476
    %v2055 = vunpack.c.h.b16 %v1476
    %v2056 = vunpack.c.l.b16 %v1477
    %v2057 = vunpack.c.h.b16 %v1477
    %v2058 = vunpack.c.l.b16 %v1478
    %v2059 = vunpack.c.h.b16 %v1478
    %v2060 = vunpack.c.l.b16 %v1479
    %v2061 = vunpack.c.l.b16 %v1480
    %v2062 = vunpack.c.h.b16 %v1480
    %v2063 = vunpack.c.l.b16 %v1481
    %v2064 = vunpack.c.h.b16 %v1481
    %v2065 = vunpack.c.l.b16 %v1482
    %v2066 = vunpack.c.h.b16 %v1482
    %v2067 = vunpack.c.l.b16 %v1483
    %v2068 = vunpack.c.l.b16 %v1484
    %v2069 = vunpack.c.h.b16 %v1484
    %v2070 = vunpack.c.l.b16 %v1485
    %v2071 = vunpack.c.h.b16 %v1485
    %v2072 = vunpack.c.l.b16 %v1486
    %v2073 = vunpack.c.h.b16 %v1486
    %v2074 = vunpack.c.l.b16 %v1487
    %v2075 = vpack.c.b16 %v1732, %v1725
    %v2076 = vpack.c.b16 %v1733, %v1726
    %v2077 = vpack.c.b16 %v1734, %v1727
    %v2078 = vpack.c.b16 %v1735, %v1728
    %v2079 = vpack.c.b16 %v1736, %v1729
    %v2080 = vpack.c.b16 %v1737, %v1730
    %v2081 = vpack.c.b16 %v1738, %v1731
    %v2082 = vpack.c.b16 %v1746, %v1739
    %v2083 = vpack.c.b16 %v1747, %v1740
    %v2084 = vpack.c.b16 %v1748, %v1741
    %v2085 = vpack.c.b16 %v1749, %v1742
    %v2086 = vpack.c.b16 %v1750, %v1743
    %v2087 = vpack.c.b16 %v1751, %v1744
    %v2088 = vpack.c.b16 %v1752, %v1745
    %v2089 = vpack.c.b16 %v1760, %v1753
    %v2090 = vpack.c.b16 %v1761, %v1754
    %v2091 = vpack.c.b16 %v1762, %v1755
    %v2092 = vpack.c.b16 %v1763, %v1756
    %v2093 = vpack.c.b16 %v1764, %v1757
    %v2094 = vpack.c.b16 %v1765, %v1758
    %v2095 = vpack.c.b16 %v1766, %v1759
    %v2096 = vpack.c.b16 %v1774, %v1767
    %v2097 = vpack.c.b16 %v1775, %v1768
    %v2098 = vpack.c.b16 %v1776, %v1769
    %v2099 = vpack.c.b16 %v1777, %v1770
    %v2100 = vpack.c.b16 %v1778, %v1771
    %v2101 = vpack.c.b16 %v1779, %v1772
    %v2102 = vpack.c.b16 %v1780, %v1773
    %v2103 = vpack.c.b16 %v1788, %v1781
    %v2104 = vpack.c.b16 %v1789, %v1782
    %v2105 = vpack.c.b16 %v1790, %v1783
    %v2106 = vpack.c.b16 %v1791, %v1784
    %v2107 = vpack.c.b16 %v1792, %v1785
    %v2108 = vpack.c.b16 %v1793, %v1786
    %v2109 = vpack.c.b16 %v1794, %v1787
    %v2110 = vpack.c.b16 %v1802, %v1795
    %v2111 = vpack.c.b16 %v1803, %v1796
    %v2112 = vpack.c.b16 %v1804, %v1797
    %v2113 = vpack.c.b16 %v1805, %v1798
    %v2114 = vpack.c.b16 %v1806, %v1799
    %v2115 = vpack.c.b16 %v1807, %v1800
    %v2116 = vpack.c.b16 %v1808, %v1801
    %v2117 = vpack.c.b16 %v1816, %v1809
    %v2118 = vpack.c.b16 %v1817, %v1810
    %v2119 = vpack.c.b16 %v1818, %v1811
    %v2120 = vpack.c.b16 %v1819, %v1812
    %v2121 = vpack.c.b16 %v1820, %v1813
    %v2122 = vpack.c.b16 %v1821, %v1814
    %v2123 = vpack.c.b16 %v1822, %v1815
    %v2124 = vpack.c.b16 %v1830, %v1823
    %v2125 = vpack.c.b16 %v1831, %v1824
    %v2126 = vpack.c.b16 %v1832, %v1825
    %v2127 = vpack.c.b16 %v1833, %v1826
    %v2128 = vpack.c.b16 %v1834, %v1827
    %v2129 = vpack.c.b16 %v1835, %v1828
    %v2130 = vpack.c.b16 %v1836, %v1829
    %v2131 = vpack.c.b16 %v1844, %v1837
    %v2132 = vpack.c.b16 %v1845, %v1838
    %v2133 = vpack.c.b16 %v1846, %v1839
    %v2134 = vpack.c.b16 %v1847, %v1840
    %v2135 = vpack.c.b16 %v1848, %v1841
    %v2136 = vpack.c.b16 %v1849, %v1842
    %v2137 = vpack.c.b16 %v1850, %v1843
    %v2138 = vpack.c.b16 %v1858, %v1851
    %v2139 = vpack.c.b16 %v1859, %v1852
    %v2140 = vpack.c.b16 %v1860, %v1853
    %v2141 = vpack.c.b16 %v1861, %v1854
    %v2142 = vpack.c.b16 %v1862, %v1855
    %v2143 = vpack.c.b16 %v1863, %v1856
    %v2144 = vpack.c.b16 %v1864, %v1857
    %v2145 = vpack.c.b16 %v1872, %v1865
    %v2146 = vpack.c.b16 %v1873, %v1866
    %v2147 = vpack.c.b16 %v1874, %v1867
    %v2148 = vpack.c.b16 %v1875, %v1868
    %v2149 = vpack.c.b16 %v1876, %v1869
    %v2150 = vpack.c.b16 %v1877, %v1870
    %v2151 = vpack.c.b16 %v1878, %v1871
    %v2152 = vpack.c.b16 %v1886, %v1879
    %v2153 = vpack.c.b16 %v1887, %v1880
    %v2154 = vpack.c.b16 %v1888, %v1881
    %v2155 = vpack.c.b16 %v1889, %v1882
    %v2156 = vpack.c.b16 %v1890, %v1883
    %v2157 = vpack.c.b16 %v1891, %v1884
    %v2158 = vpack.c.b16 %v1892, %v1885
    %v2159 = vpack.c.b16 %v1900, %v1893
    %v2160 = vpack.c.b16 %v1901, %v1894
    %v2161 = vpack.c.b16 %v1902, %v1895
    %v2162 = vpack.c.b16 %v1903, %v1896
    %v2163 = vpack.c.b16 %v1904, %v1897
    %v2164 = vpack.c.b16 %v1905, %v1898
    %v2165 = vpack.c.b16 %v1906, %v1899
    %v2166 = vpack.c.b16 %v1914, %v1907
    %v2167 = vpack.c.b16 %v1915, %v1908
    %v2168 = vpack.c.b16 %v1916, %v1909
    %v2169 = vpack.c.b16 %v1917, %v1910
    %v2170 = vpack.c.b16 %v1918, %v1911
    %v2171 = vpack.c.b16 %v1919, %v1912
    %v2172 = vpack.c.b16 %v1920, %v1913
    %v2173 = vpack.c.b16 %v1928, %v1921
    %v2174 = vpack.c.b16 %v1929, %v1922
    %v2175 = vpack.c.b16 %v1930, %v1923
    %v2176 = vpack.c.b16 %v1931, %v1924
    %v2177 = vpack.c.b16 %v1932, %v1925
    %v2178 = vpack.c.b16 %v1933, %v1926
    %v2179 = vpack.c.b16 %v1934, %v1927
    %v2180 = vpack.c.b16 %v1942, %v1935
    %v2181 = vpack.c.b16 %v1943, %v1936
    %v2182 = vpack.c.b16 %v1944, %v1937
    %v2183 = vpack.c.b16 %v1945, %v1938
    %v2184 = vpack.c.b16 %v1946, %v1939
    %v2185 = vpack.c.b16 %v1947, %v1940
    %v2186 = vpack.c.b16 %v1948, %v1941
    %v2187 = vpack.c.b16 %v1956, %v1949
    %v2188 = vpack.c.b16 %v1957, %v1950
    %v2189 = vpack.c.b16 %v1958, %v1951
    %v2190 = vpack.c.b16 %v1959, %v1952
    %v2191 = vpack.c.b16 %v1960, %v1953
    %v2192 = vpack.c.b16 %v1961, %v1954
    %v2193 = vpack.c.b16 %v1962, %v1955
    %v2194 = vpack.c.b16 %v1970, %v1963
    %v2195 = vpack.c.b16 %v1971, %v1964
    %v2196 = vpack.c.b16 %v1972, %v1965
    %v2197 = vpack.c.b16 %v1973, %v1966
    %v2198 = vpack.c.b16 %v1974, %v1967
    %v2199 = vpack.c.b16 %v1975, %v1968
    %v2200 = vpack.c.b16 %v1976, %v1969
    %v2201 = vpack.c.b16 %v1984, %v1977
    %v2202 = vpack.c.b16 %v1985, %v1978
    %v2203 = vpack.c.b16 %v1986, %v1979
    %v2204 = vpack.c.b16 %v1987, %v1980
    %v2205 = vpack.c.b16 %v1988, %v1981
    %v2206 = vpack.c.b16 %v1989, %v1982
    %v2207 = vpack.c.b16 %v1990, %v1983
    %v2208 = vpack.c.b16 %v1998, %v1991
    %v2209 = vpack.c.b16 %v1999, %v1992
    %v2210 = vpack.c.b16 %v2000, %v1993
    %v2211 = vpack.c.b16 %v2001, %v1994
    %v2212 = vpack.c.b16 %v2002, %v1995
    %v2213 = vpack.c.b16 %v2003, %v1996
    %v2214 = vpack.c.b16 %v2004, %v1997
    %v2215 = vpack.c.b16 %v2012, %v2005
    %v2216 = vpack.c.b16 %v2013, %v2006
    %v2217 = vpack.c.b16 %v2014, %v2007
    %v2218 = vpack.c.b16 %v2015, %v2008
    %v2219 = vpack.c.b16 %v2016, %v2009
    %v2220 = vpack.c.b16 %v2017, %v2010
    %v2221 = vpack.c.b16 %v2018, %v2011
    %v2222 = vpack.c.b16 %v2026, %v2019
    %v2223 = vpack.c.b16 %v2027, %v2020
    %v2224 = vpack.c.b16 %v2028, %v2021
    %v2225 = vpack.c.b16 %v2029, %v2022
    %v2226 = vpack.c.b16 %v2030, %v2023
    %v2227 = vpack.c.b16 %v2031, %v2024
    %v2228 = vpack.c.b16 %v2032, %v2025
    %v2229 = vpack.c.b16 %v2040, %v2033
    %v2230 = vpack.c.b16 %v2041, %v2034
    %v2231 = vpack.c.b16 %v2042, %v2035
    %v2232 = vpack.c.b16 %v2043, %v2036
    %v2233 = vpack.c.b16 %v2044, %v2037
    %v2234 = vpack.c.b16 %v2045, %v2038
    %v2235 = vpack.c.b16 %v2046, %v2039
    %v2236 = vpack.c.b16 %v2054, %v2047
    %v2237 = vpack.c.b16 %v2055, %v2048
    %v2238 = vpack.c.b16 %v2056, %v2049
    %v2239 = vpack.c.b16 %v2057, %v2050
    %v2240 = vpack.c.b16 %v2058, %v2051
    %v2241 = vpack.c.b16 %v2059, %v2052
    %v2242 = vpack.c.b16 %v2060, %v2053
    %v2243 = vpack.c.b16 %v2068, %v2061
    %v2244 = vpack.c.b16 %v2069, %v2062
    %v2245 = vpack.c.b16 %v2070, %v2063
    %v2246 = vpack.c.b16 %v2071, %v2064
    %v2247 = vpack.c.b16 %v2072, %v2065
    %v2248 = vpack.c.b16 %v2073, %v2066
    %v2249 = vpack.c.b16 %v2074, %v2067
    %v2426 = vsel %vm1104, %v1287, 0
    %2428 = vmatprep.subr.bf16.mxu0 %v2125
    %2429 = vmatpush1.bf16.msra.mxu0 %v2124
    %2430 = vmatprep.subr.bf16.mxu0 %v2118
    %2431 = vmatpush1.bf16.msra.mxu0 %v2117
    %2432 = vmatprep.subr.bf16.mxu0 %v2111
    %2433 = vmatpush1.bf16.msra.mxu0 %v2110
    %2434 = vmatprep.subr.bf16.mxu0 %v2104
    %2435 = vmatpush1.bf16.msra.mxu0 %v2103
    %2436 = vmatprep.subr.bf16.mxu0 %v2097
    %2437 = vmatpush1.bf16.msra.mxu0 %v2096
    %2438 = vmatprep.subr.bf16.mxu0 %v2090
    %2439 = vmatpush1.bf16.msra.mxu0 %v2089
    %2440 = vmatprep.subr.bf16.mxu0 %v2083
    %2441 = vmatpush1.bf16.msra.mxu0 %v2082
    %2442 = vmatprep.subr.bf16.mxu0 %v2076
    %2443 = vmatpush1.bf16.msra.mxu0 %v2075
    %2444 = vmatprep.subr.bf16.mxu0 %v2181
    %2445 = vmatpush2.bf16.msra.mxu0 %v2180
    %2446 = vmatprep.subr.bf16.mxu0 %v2174
    %2447 = vmatpush2.bf16.msra.mxu0 %v2173
    %2448 = vmatprep.subr.bf16.mxu0 %v2167
    %2449 = vmatpush2.bf16.msra.mxu0 %v2166
    %2450 = vmatprep.subr.bf16.mxu0 %v2160
    %2451 = vmatpush2.bf16.msra.mxu0 %v2159
    %2452 = vmatprep.subr.bf16.mxu0 %v2153
    %2453 = vmatpush2.bf16.msra.mxu0 %v2152
    %2454 = vmatprep.subr.bf16.mxu0 %v2146
    %2455 = vmatpush2.bf16.msra.mxu0 %v2145
    %2456 = vmatprep.subr.bf16.mxu0 %v2139
    %2457 = vmatpush2.bf16.msra.mxu0 %v2138
    %2458 = vmatprep.subr.bf16.mxu0 %v2132
    %2459 = vmatpush2.bf16.msra.mxu0 %v2131
    %2460 = vmatprep.mubr.bf16.mxu0 %v1285
    %2461 = vmatmul.mubr.bf16.gmra.mxu0 %v1284
    %v2462 = vpop.f32.mrf.mxu0
    %v2463 = vadd.f32 %v1493, %v2462
    %v2464 = vpop.f32.mrf.mxu0
    %v2465 = vadd.f32 %v1497, %v2464
    %v2466 = vpop.f32.mrf.mxu0
    %v2467 = vpop.f32.mrf.mxu0
    %2468 = vdwg.mxu0
    %2469 = vmatprep.subr.bf16.mxu0 %v2237
    %2470 = vmatpush1.bf16.msra.mxu0 %v2236
    %2471 = vmatprep.subr.bf16.mxu0 %v2230
    %2472 = vmatpush1.bf16.msra.mxu0 %v2229
    %2473 = vmatprep.subr.bf16.mxu0 %v2223
    %2474 = vmatpush1.bf16.msra.mxu0 %v2222
    %2475 = vmatprep.subr.bf16.mxu0 %v2216
    %2476 = vmatpush1.bf16.msra.mxu0 %v2215
    %2477 = vmatprep.subr.bf16.mxu0 %v2209
    %2478 = vmatpush1.bf16.msra.mxu0 %v2208
    %2479 = vmatprep.subr.bf16.mxu0 %v2202
    %2480 = vmatpush1.bf16.msra.mxu0 %v2201
    %2481 = vmatprep.subr.bf16.mxu0 %v2195
    %2482 = vmatpush1.bf16.msra.mxu0 %v2194
    %2483 = vmatprep.subr.bf16.mxu0 %v2188
    %2484 = vmatpush1.bf16.msra.mxu0 %v2187
    %2485 = vmatprep.subr.bf16.mxu0 0
    %2486 = vmatpush2.bf16.msra.mxu0 0
    %2487 = vmatprep.subr.bf16.mxu0 0
    %2488 = vmatpush2.bf16.msra.mxu0 0
    %2489 = vmatprep.subr.bf16.mxu0 0
    %2490 = vmatpush2.bf16.msra.mxu0 0
    %2491 = vmatprep.subr.bf16.mxu0 0
    %2492 = vmatpush2.bf16.msra.mxu0 0
    %2493 = vmatprep.subr.bf16.mxu0 0
    %2494 = vmatpush2.bf16.msra.mxu0 0
    %2495 = vmatprep.subr.bf16.mxu0 0
    %2496 = vmatpush2.bf16.msra.mxu0 0
    %2497 = vmatprep.subr.bf16.mxu0 0
    %2498 = vmatpush2.bf16.msra.mxu0 0
    %2499 = vmatprep.subr.bf16.mxu0 %v2244
    %2500 = vmatpush2.bf16.msra.mxu0 %v2243
    %2501 = vmatprep.mubr.bf16.mxu0 %v2426
    %2502 = vmatmul.mubr.bf16.gmra.mxu0 %v1286
    %v2503 = vpop.f32.mrf.mxu0
    %v2504 = vadd.f32 %v2463, %v2503
    %v2505 = vpop.f32.mrf.mxu0
    %v2506 = vadd.f32 %v2465, %v2505
    %v2507 = vpop.f32.mrf.mxu0
    %v2508 = vpop.f32.mrf.mxu0
    %2509 = vdwg.mxu0
    %2510 = vmatprep.subr.bf16.mxu0 %v2127
    %2511 = vmatpush1.bf16.msra.mxu0 %v2126
    %2512 = vmatprep.subr.bf16.mxu0 %v2120
    %2513 = vmatpush1.bf16.msra.mxu0 %v2119
    %2514 = vmatprep.subr.bf16.mxu0 %v2113
    %2515 = vmatpush1.bf16.msra.mxu0 %v2112
    %2516 = vmatprep.subr.bf16.mxu0 %v2106
    %2517 = vmatpush1.bf16.msra.mxu0 %v2105
    %2518 = vmatprep.subr.bf16.mxu0 %v2099
    %2519 = vmatpush1.bf16.msra.mxu0 %v2098
    %2520 = vmatprep.subr.bf16.mxu0 %v2092
    %2521 = vmatpush1.bf16.msra.mxu0 %v2091
    %2522 = vmatprep.subr.bf16.mxu0 %v2085
    %2523 = vmatpush1.bf16.msra.mxu0 %v2084
    %2524 = vmatprep.subr.bf16.mxu0 %v2078
    %2525 = vmatpush1.bf16.msra.mxu0 %v2077
    %2526 = vmatprep.subr.bf16.mxu0 %v2183
    %2527 = vmatpush2.bf16.msra.mxu0 %v2182
    %2528 = vmatprep.subr.bf16.mxu0 %v2176
    %2529 = vmatpush2.bf16.msra.mxu0 %v2175
    %2530 = vmatprep.subr.bf16.mxu0 %v2169
    %2531 = vmatpush2.bf16.msra.mxu0 %v2168
    %2532 = vmatprep.subr.bf16.mxu0 %v2162
    %2533 = vmatpush2.bf16.msra.mxu0 %v2161
    %2534 = vmatprep.subr.bf16.mxu0 %v2155
    %2535 = vmatpush2.bf16.msra.mxu0 %v2154
    %2536 = vmatprep.subr.bf16.mxu0 %v2148
    %2537 = vmatpush2.bf16.msra.mxu0 %v2147
    %2538 = vmatprep.subr.bf16.mxu0 %v2141
    %2539 = vmatpush2.bf16.msra.mxu0 %v2140
    %2540 = vmatprep.subr.bf16.mxu0 %v2134
    %2541 = vmatpush2.bf16.msra.mxu0 %v2133
    %2542 = vmatprep.mubr.bf16.mxu0 %v1285
    %2543 = vmatmul.mubr.bf16.gmra.mxu0 %v1284
    %v2544 = vpop.f32.mrf.mxu0
    %v2545 = vadd.f32 %v1501, %v2544
    %v2546 = vpop.f32.mrf.mxu0
    %v2547 = vadd.f32 %v1505, %v2546
    %v2548 = vpop.f32.mrf.mxu0
    %v2549 = vpop.f32.mrf.mxu0
    %2550 = vdwg.mxu0
    %2551 = vmatprep.subr.bf16.mxu0 %v2239
    %2552 = vmatpush1.bf16.msra.mxu0 %v2238
    %2553 = vmatprep.subr.bf16.mxu0 %v2232
    %2554 = vmatpush1.bf16.msra.mxu0 %v2231
    %2555 = vmatprep.subr.bf16.mxu0 %v2225
    %2556 = vmatpush1.bf16.msra.mxu0 %v2224
    %2557 = vmatprep.subr.bf16.mxu0 %v2218
    %2558 = vmatpush1.bf16.msra.mxu0 %v2217
    %2559 = vmatprep.subr.bf16.mxu0 %v2211
    %2560 = vmatpush1.bf16.msra.mxu0 %v2210
    %2561 = vmatprep.subr.bf16.mxu0 %v2204
    %2562 = vmatpush1.bf16.msra.mxu0 %v2203
    %2563 = vmatprep.subr.bf16.mxu0 %v2197
    %2564 = vmatpush1.bf16.msra.mxu0 %v2196
    %2565 = vmatprep.subr.bf16.mxu0 %v2190
    %2566 = vmatpush1.bf16.msra.mxu0 %v2189
    %2567 = vmatprep.subr.bf16.mxu0 0
    %2568 = vmatpush2.bf16.msra.mxu0 0
    %2569 = vmatprep.subr.bf16.mxu0 0
    %2570 = vmatpush2.bf16.msra.mxu0 0
    %2571 = vmatprep.subr.bf16.mxu0 0
    %2572 = vmatpush2.bf16.msra.mxu0 0
    %2573 = vmatprep.subr.bf16.mxu0 0
    %2574 = vmatpush2.bf16.msra.mxu0 0
    %2575 = vmatprep.subr.bf16.mxu0 0
    %2576 = vmatpush2.bf16.msra.mxu0 0
    %2577 = vmatprep.subr.bf16.mxu0 0
    %2578 = vmatpush2.bf16.msra.mxu0 0
    %2579 = vmatprep.subr.bf16.mxu0 0
    %2580 = vmatpush2.bf16.msra.mxu0 0
    %2581 = vmatprep.subr.bf16.mxu0 %v2246
    %2582 = vmatpush2.bf16.msra.mxu0 %v2245
    %2583 = vmatprep.mubr.bf16.mxu0 %v2426
    %2584 = vmatmul.mubr.bf16.gmra.mxu0 %v1286
    %v2585 = vpop.f32.mrf.mxu0
    %v2586 = vadd.f32 %v2545, %v2585
    %v2587 = vpop.f32.mrf.mxu0
    %v2588 = vadd.f32 %v2547, %v2587
    %v2589 = vpop.f32.mrf.mxu0
    %v2590 = vpop.f32.mrf.mxu0
    %2591 = vdwg.mxu0
    %2592 = vmatprep.subr.bf16.mxu0 %v2129
    %2593 = vmatpush1.bf16.msra.mxu0 %v2128
    %2594 = vmatprep.subr.bf16.mxu0 %v2122
    %2595 = vmatpush1.bf16.msra.mxu0 %v2121
    %2596 = vmatprep.subr.bf16.mxu0 %v2115
    %2597 = vmatpush1.bf16.msra.mxu0 %v2114
    %2598 = vmatprep.subr.bf16.mxu0 %v2108
    %2599 = vmatpush1.bf16.msra.mxu0 %v2107
    %2600 = vmatprep.subr.bf16.mxu0 %v2101
    %2601 = vmatpush1.bf16.msra.mxu0 %v2100
    %2602 = vmatprep.subr.bf16.mxu0 %v2094
    %2603 = vmatpush1.bf16.msra.mxu0 %v2093
    %2604 = vmatprep.subr.bf16.mxu0 %v2087
    %2605 = vmatpush1.bf16.msra.mxu0 %v2086
    %2606 = vmatprep.subr.bf16.mxu0 %v2080
    %2607 = vmatpush1.bf16.msra.mxu0 %v2079
    %2608 = vmatprep.subr.bf16.mxu0 %v2185
    %2609 = vmatpush2.bf16.msra.mxu0 %v2184
    %2610 = vmatprep.subr.bf16.mxu0 %v2178
    %2611 = vmatpush2.bf16.msra.mxu0 %v2177
    %2612 = vmatprep.subr.bf16.mxu0 %v2171
    %2613 = vmatpush2.bf16.msra.mxu0 %v2170
    %2614 = vmatprep.subr.bf16.mxu0 %v2164
    %2615 = vmatpush2.bf16.msra.mxu0 %v2163
    %2616 = vmatprep.subr.bf16.mxu0 %v2157
    %2617 = vmatpush2.bf16.msra.mxu0 %v2156
    %2618 = vmatprep.subr.bf16.mxu0 %v2150
    %2619 = vmatpush2.bf16.msra.mxu0 %v2149
    %2620 = vmatprep.subr.bf16.mxu0 %v2143
    %2621 = vmatpush2.bf16.msra.mxu0 %v2142
    %2622 = vmatprep.subr.bf16.mxu0 %v2136
    %2623 = vmatpush2.bf16.msra.mxu0 %v2135
    %2624 = vmatprep.mubr.bf16.mxu0 %v1285
    %2625 = vmatmul.mubr.bf16.gmra.mxu0 %v1284
    %v2626 = vpop.f32.mrf.mxu0
    %v2627 = vadd.f32 %v1509, %v2626
    %v2628 = vpop.f32.mrf.mxu0
    %v2629 = vadd.f32 %v1513, %v2628
    %v2630 = vpop.f32.mrf.mxu0
    %v2631 = vpop.f32.mrf.mxu0
    %2632 = vdwg.mxu0
    %2633 = vmatprep.subr.bf16.mxu0 %v2241
    %2634 = vmatpush1.bf16.msra.mxu0 %v2240
    %2635 = vmatprep.subr.bf16.mxu0 %v2234
    %2636 = vmatpush1.bf16.msra.mxu0 %v2233
    %2637 = vmatprep.subr.bf16.mxu0 %v2227
    %2638 = vmatpush1.bf16.msra.mxu0 %v2226
    %2639 = vmatprep.subr.bf16.mxu0 %v2220
    %2640 = vmatpush1.bf16.msra.mxu0 %v2219
    %2641 = vmatprep.subr.bf16.mxu0 %v2213
    %2642 = vmatpush1.bf16.msra.mxu0 %v2212
    %2643 = vmatprep.subr.bf16.mxu0 %v2206
    %2644 = vmatpush1.bf16.msra.mxu0 %v2205
    %2645 = vmatprep.subr.bf16.mxu0 %v2199
    %2646 = vmatpush1.bf16.msra.mxu0 %v2198
    %2647 = vmatprep.subr.bf16.mxu0 %v2192
    %2648 = vmatpush1.bf16.msra.mxu0 %v2191
    %2649 = vmatprep.subr.bf16.mxu0 0
    %2650 = vmatpush2.bf16.msra.mxu0 0
    %2651 = vmatprep.subr.bf16.mxu0 0
    %2652 = vmatpush2.bf16.msra.mxu0 0
    %2653 = vmatprep.subr.bf16.mxu0 0
    %2654 = vmatpush2.bf16.msra.mxu0 0
    %2655 = vmatprep.subr.bf16.mxu0 0
    %2656 = vmatpush2.bf16.msra.mxu0 0
    %2657 = vmatprep.subr.bf16.mxu0 0
    %2658 = vmatpush2.bf16.msra.mxu0 0
    %2659 = vmatprep.subr.bf16.mxu0 0
    %2660 = vmatpush2.bf16.msra.mxu0 0
    %2661 = vmatprep.subr.bf16.mxu0 0
    %2662 = vmatpush2.bf16.msra.mxu0 0
    %2663 = vmatprep.subr.bf16.mxu0 %v2248
    %2664 = vmatpush2.bf16.msra.mxu0 %v2247
    %2665 = vmatprep.mubr.bf16.mxu0 %v2426
    %2666 = vmatmul.mubr.bf16.gmra.mxu0 %v1286
    %v2667 = vpop.f32.mrf.mxu0
    %v2668 = vadd.f32 %v2627, %v2667
    %v2669 = vpop.f32.mrf.mxu0
    %v2670 = vadd.f32 %v2629, %v2669
    %v2671 = vpop.f32.mrf.mxu0
    %v2672 = vpop.f32.mrf.mxu0
    %2673 = vdwg.mxu0
    %2674 = vmatprep.subr.bf16.mxu0 0
    %2675 = vmatpush1.bf16.msra.mxu0 %v2130
    %2676 = vmatprep.subr.bf16.mxu0 0
    %2677 = vmatpush1.bf16.msra.mxu0 %v2123
    %2678 = vmatprep.subr.bf16.mxu0 0
    %2679 = vmatpush1.bf16.msra.mxu0 %v2116
    %2680 = vmatprep.subr.bf16.mxu0 0
    %2681 = vmatpush1.bf16.msra.mxu0 %v2109
    %2682 = vmatprep.subr.bf16.mxu0 0
    %2683 = vmatpush1.bf16.msra.mxu0 %v2102
    %2684 = vmatprep.subr.bf16.mxu0 0
    %2685 = vmatpush1.bf16.msra.mxu0 %v2095
    %2686 = vmatprep.subr.bf16.mxu0 0
    %2687 = vmatpush1.bf16.msra.mxu0 %v2088
    %2688 = vmatprep.subr.bf16.mxu0 0
    %2689 = vmatpush1.bf16.msra.mxu0 %v2081
    %2690 = vmatprep.subr.bf16.mxu0 0
    %2691 = vmatpush2.bf16.msra.mxu0 %v2186
    %2692 = vmatprep.subr.bf16.mxu0 0
    %2693 = vmatpush2.bf16.msra.mxu0 %v2179
    %2694 = vmatprep.subr.bf16.mxu0 0
    %2695 = vmatpush2.bf16.msra.mxu0 %v2172
    %2696 = vmatprep.subr.bf16.mxu0 0
    %2697 = vmatpush2.bf16.msra.mxu0 %v2165
    %2698 = vmatprep.subr.bf16.mxu0 0
    %2699 = vmatpush2.bf16.msra.mxu0 %v2158
    %2700 = vmatprep.subr.bf16.mxu0 0
    %2701 = vmatpush2.bf16.msra.mxu0 %v2151
    %2702 = vmatprep.subr.bf16.mxu0 0
    %2703 = vmatpush2.bf16.msra.mxu0 %v2144
    %2704 = vmatprep.subr.bf16.mxu0 0
    %2705 = vmatpush2.bf16.msra.mxu0 %v2137
    %2706 = vmatprep.mubr.bf16.mxu0 %v1285
    %2707 = vmatmul.mubr.bf16.gmra.mxu0 %v1284
    %v2708 = vpop.f32.mrf.mxu0
    %v2709 = vadd.f32 %v1517, %v2708
    %v2710 = vpop.f32.mrf.mxu0
    %v2711 = vpop.f32.mrf.mxu0
    %v2712 = vpop.f32.mrf.mxu0
    %2713 = vdwg.mxu0
    %2714 = vmatprep.subr.bf16.mxu0 0
    %2715 = vmatpush1.bf16.msra.mxu0 %v2242
    %2716 = vmatprep.subr.bf16.mxu0 0
    %2717 = vmatpush1.bf16.msra.mxu0 %v2235
    %2718 = vmatprep.subr.bf16.mxu0 0
    %2719 = vmatpush1.bf16.msra.mxu0 %v2228
    %2720 = vmatprep.subr.bf16.mxu0 0
    %2721 = vmatpush1.bf16.msra.mxu0 %v2221
    %2722 = vmatprep.subr.bf16.mxu0 0
    %2723 = vmatpush1.bf16.msra.mxu0 %v2214
    %2724 = vmatprep.subr.bf16.mxu0 0
    %2725 = vmatpush1.bf16.msra.mxu0 %v2207
    %2726 = vmatprep.subr.bf16.mxu0 0
    %2727 = vmatpush1.bf16.msra.mxu0 %v2200
    %2728 = vmatprep.subr.bf16.mxu0 0
    %2729 = vmatpush1.bf16.msra.mxu0 %v2193
    %2730 = vmatprep.subr.bf16.mxu0 0
    %2731 = vmatpush2.bf16.msra.mxu0 0
    %2732 = vmatprep.subr.bf16.mxu0 0
    %2733 = vmatpush2.bf16.msra.mxu0 0
    %2734 = vmatprep.subr.bf16.mxu0 0
    %2735 = vmatpush2.bf16.msra.mxu0 0
    %2736 = vmatprep.subr.bf16.mxu0 0
    %2737 = vmatpush2.bf16.msra.mxu0 0
    %2738 = vmatprep.subr.bf16.mxu0 0
    %2739 = vmatpush2.bf16.msra.mxu0 0
    %2740 = vmatprep.subr.bf16.mxu0 0
    %2741 = vmatpush2.bf16.msra.mxu0 0
    %2742 = vmatprep.subr.bf16.mxu0 0
    %2743 = vmatpush2.bf16.msra.mxu0 0
    %2744 = vmatprep.subr.bf16.mxu0 0
    %2745 = vmatpush2.bf16.msra.mxu0 %v2249
    %2746 = vmatprep.mubr.bf16.mxu0 %v2426
    %2747 = vmatmul.mubr.bf16.gmra.mxu0 %v1286
    %v2748 = vpop.f32.mrf.mxu0
    %v2749 = vadd.f32 %v2709, %v2748
    %v2750 = vpop.f32.mrf.mxu0
    %v2751 = vpop.f32.mrf.mxu0
    %v2752 = vpop.f32.mrf.mxu0
    %2753 = vdwg.mxu0
    %v2754 = vxor.u32 %v2504, 2147483648
    %v2755 = vxor.u32 %v2506, 2147483648
    %v2756 = vxor.u32 %v2586, 2147483648
    %v2757 = vxor.u32 %v2588, 2147483648
    %v2758 = vxor.u32 %v2668, 2147483648
    %v2759 = vxor.u32 %v2670, 2147483648
    %v2760 = vxor.u32 %v2749, 2147483648
    %v2761 = vmul.f32 %v2754, 1.442695
    %v2762 = vpow.pop %v2761
    %v2763 = vmul.f32 %v2755, 1.442695
    %v2764 = vpow.pop %v2763
    %v2765 = vmul.f32 %v2756, 1.442695
    %v2766 = vpow.pop %v2765
    %v2767 = vmul.f32 %v2757, 1.442695
    %v2768 = vpow.pop %v2767
    %v2769 = vmul.f32 %v2758, 1.442695
    %v2770 = vpow.pop %v2769
    %v2771 = vmul.f32 %v2759, 1.442695
    %v2772 = vpow.pop %v2771
    %v2773 = vmul.f32 %v2760, 1.442695
    %v2774 = vpow.pop %v2773
    %v2775 = vadd.f32 %v2762, 1.0
    %v2776 = vadd.f32 %v2764, 1.0
    %v2777 = vadd.f32 %v2766, 1.0
    %v2778 = vadd.f32 %v2768, 1.0
    %v2779 = vadd.f32 %v2770, 1.0
    %v2780 = vadd.f32 %v2772, 1.0
    %v2781 = vadd.f32 %v2774, 1.0
    %v2782 = vrcp.pop %v2775
    %v2783 = vmul.f32 1.0, %v2782
    %v2784 = vrcp.pop %v2776
    %v2785 = vmul.f32 1.0, %v2784
    %v2786 = vrcp.pop %v2777
    %v2787 = vmul.f32 1.0, %v2786
    %v2788 = vrcp.pop %v2778
    %v2789 = vmul.f32 1.0, %v2788
    %v2790 = vrcp.pop %v2779
    %v2791 = vmul.f32 1.0, %v2790
    %v2792 = vrcp.pop %v2780
    %v2793 = vmul.f32 1.0, %v2792
    %v2794 = vrcp.pop %v2781
    %v2795 = vmul.f32 1.0, %v2794
    %2796 = vst [vmem:[#allocation5] sm:$0xff] %v2783
    %2797 = vst [vmem:[#allocation5 + $0x8] sm:$0xff] %v2785
    %2798 = vst [vmem:[#allocation5 + $0x10] sm:$0xff] %v2787
    %2799 = vst [vmem:[#allocation5 + $0x18] sm:$0xff] %v2789
    %2800 = vst [vmem:[#allocation5 + $0x20] sm:$0xff] %v2791
    %2801 = vst [vmem:[#allocation5 + $0x28] sm:$0xff] %v2793
    %2802 = vst [vmem:[#allocation5 + $0x30] sm:$0xff] %v2795
    // Predicated region
    $region34: #{decoder_forward.1} parent=1 // pred_check
      _
    $region35: #{decoder_forward.1} parent=1 // pred_check_branch
      %2804 = sbr.rel (0) target = $region37
    $region36: #{decoder_forward.1} parent=1 // pred_region
      %s2806 = ssub.s32 896, 896
      %2807 = vsyncadd [#allocation4], %s2806
      %s2809 = sshll.u32 [#allocation5], 4
      %s2810 = int_to_ptr.vmem [resolvable:$true] %s2809
      %2812 = dma.vmem_to_hbm [thread:$0]  %s2810, 896, %s7, [#allocation4]
    $region37: #{decoder_forward.1} parent=1 // pred_fallthru
      _
    // Predicated region
    $region38: #{decoder_forward.1} parent=1 // pred_check
      _
    $region39: #{decoder_forward.1} parent=1 // pred_check_branch
      %2814 = sbr.rel (0) target = $region41
    $region40: #{decoder_forward.1} parent=1 // pred_region
      %2815 = dma.done [#allocation4], 896
    $region41: #{decoder_forward.1} parent=1 // pred_fallthru
      _
    %2816 = vsyncpa [#allocation3], 1
    %2817 = vsyncpa [#allocation4], 1

</llo_original>
